<compile_context>
chip_gen: v5e
topology: v5e:2x2
jax: 0.10.0
libtpu: 0.0.40
codegen_flags: <defaults>
</compile_context>

<pallas_src>
import functools

import numpy as np
import jax
import jax.numpy as jnp
from jax.experimental import pallas as pl
from jax.experimental.pallas import tpu as pltpu

INPUT_SEQUENCE_LENGTH = 6
STD_EPSILON = 1e-8

TILE_E = 512      # edge rows per grid step (lane-aligned: multiple of 128)
MAX_TILE_N = 256  # node rows per grid step (cap)


def _round_up(x, m):
    return ((x + m - 1) // m) * m


# ----------------------------------------------------------------------------
# Fused edge pipeline: features + edge MLP + one-hot scatter-add (accumulator)
# ----------------------------------------------------------------------------
def _edge_agg_kernel(recv_ref, spos_ref, rpos_ref,
                     w1d_ref, w1r_ref, b1_ref, w2_ref, b2_ref,
                     agg_ref, *, inv_radius, n_pad):
    @pl.when(pl.program_id(0) == 0)
    def _():
        agg_ref[...] = jnp.zeros_like(agg_ref)

    # edge features: normalized relative displacement + its L2 norm
    disp = (spos_ref[...] - rpos_ref[...]) * inv_radius                # [TE, D]
    dist = jnp.sqrt(jnp.sum(disp * disp, axis=-1, keepdims=True))      # [TE, 1]

    # 2-layer edge MLP; first layer split over (disp | dist) feature groups
    h = jnp.dot(disp, w1d_ref[...], preferred_element_type=jnp.float32)
    h = h + dist * w1r_ref[...] + b1_ref[...]
    h = jnp.maximum(h, 0.0)
    h = jnp.dot(h, w2_ref[...], preferred_element_type=jnp.float32) + b2_ref[...]
    h = jnp.maximum(h, 0.0)                                            # [TE, H]

    # edge -> node scatter-add as an in-kernel one-hot matmul.  Padded edges
    # carry receiver == n_pad so they never match the iota (free masking).
    tile_e = recv_ref.shape[1]
    iota = jax.lax.broadcasted_iota(jnp.int32, (n_pad, tile_e), 0)
    onehot = (iota == recv_ref[...]).astype(jnp.float32)               # [n_pad, TE]
    agg_ref[...] += jnp.dot(onehot, h, preferred_element_type=jnp.float32)


def edge_aggregate(recv_oh, spos, rpos, w1d, w1r, b1, w2, b2,
                   *, n_pad, inv_radius):
    e_pad, d = spos.shape
    h = w2.shape[1]
    grid = (e_pad // TILE_E,)
    kernel = functools.partial(_edge_agg_kernel,
                               inv_radius=inv_radius, n_pad=n_pad)
    return pl.pallas_call(
        kernel,
        out_shape=jax.ShapeDtypeStruct((n_pad, h), jnp.float32),
        grid=grid,
        in_specs=[
            pl.BlockSpec((1, TILE_E), lambda e: (0, e)),     # receivers (one-hot)
            pl.BlockSpec((TILE_E, d), lambda e: (e, 0)),     # sender positions
            pl.BlockSpec((TILE_E, d), lambda e: (e, 0)),     # receiver positions
            pl.BlockSpec((d, h), lambda e: (0, 0)),          # weights: constant
            pl.BlockSpec((1, h), lambda e: (0, 0)),          # index map -> DMA'd
            pl.BlockSpec((1, h), lambda e: (0, 0)),          # once, VMEM resident
            pl.BlockSpec((h, h), lambda e: (0, 0)),
            pl.BlockSpec((1, h), lambda e: (0, 0)),
        ],
        out_specs=pl.BlockSpec((n_pad, h), lambda e: (0, 0)),  # resident accumulator
        compiler_params=pltpu.CompilerParams(
            dimension_semantics=("arbitrary",)),
    )(recv_oh, spos, rpos, w1d, w1r, b1, w2, b2)


# ----------------------------------------------------------------------------
# Fused node pipeline: preprocessor + node MLP + decoder + postprocessor
# ----------------------------------------------------------------------------
def _node_kernel(vel_ref, vmean_ref, vinvstd_ref, pos_ref, lo_ref, hi_ref,
                 emb_ref, agg_ref, last_ref, prev_ref,
                 wv_ref, wlo_ref, whi_ref, wemb_ref, wagg_ref, b1_ref,
                 w2_ref, b2_ref, wd_ref, bd_ref, amean_ref, astd_ref,
                 out_ref, *, inv_radius):
    # encoder preprocessor: normalized velocities + clipped boundary distances
    nv = (vel_ref[...] - vmean_ref[...]) * vinvstd_ref[...]
    pos = pos_ref[...]
    dlo = jnp.clip((pos - lo_ref[...]) * inv_radius, -1.0, 1.0)
    dhi = jnp.clip((hi_ref[...] - pos) * inv_radius, -1.0, 1.0)

    # node MLP; feature concat expressed as split matmuls (no lane shuffles,
    # intermediates never leave VMEM/vregs)
    h = (jnp.dot(nv, wv_ref[...], preferred_element_type=jnp.float32)
         + jnp.dot(dlo, wlo_ref[...], preferred_element_type=jnp.float32)
         + jnp.dot(dhi, whi_ref[...], preferred_element_type=jnp.float32)
         + jnp.dot(emb_ref[...], wemb_ref[...], preferred_element_type=jnp.float32)
         + jnp.dot(agg_ref[...], wagg_ref[...], preferred_element_type=jnp.float32)
         + b1_ref[...])
    h = jnp.maximum(h, 0.0)
    h = jnp.dot(h, w2_ref[...], preferred_element_type=jnp.float32) + b2_ref[...]
    h = jnp.maximum(h, 0.0)
    norm_acc = (jnp.dot(h, wd_ref[...], preferred_element_type=jnp.float32)
                + bd_ref[...])

    # decoder postprocessor (Euler integration), fused
    acc = norm_acc * astd_ref[...] + amean_ref[...]
    last = last_ref[...]
    out_ref[...] = last + (last - prev_ref[...]) + acc


def node_pipeline(vel, vmean, vinvstd, pos, lo, hi, emb, agg, last, prev,
                  wv, wlo, whi, wemb, wagg, b1, w2, b2, wd, bd,
                  amean, astd, *, inv_radius, tile_n):
    n_pad, d = pos.shape
    f = vel.shape[1]
    emb_w = emb.shape[1]
    h = w2.shape[1]
    grid = (n_pad // tile_n,)

    def row(cols):
        return pl.BlockSpec((tile_n, cols), lambda i: (i, 0))

    def const(rows, cols):
        return pl.BlockSpec((rows, cols), lambda i: (0, 0))

    kernel = functools.partial(_node_kernel, inv_radius=inv_radius)
    return pl.pallas_call(
        kernel,
        out_shape=jax.ShapeDtypeStruct((n_pad, d), jnp.float32),
        grid=grid,
        in_specs=[
            row(f), const(1, f), const(1, f),
            row(d), const(1, d), const(1, d),
            row(emb_w), row(h), row(d), row(d),
            const(f, h), const(d, h), const(d, h), const(emb_w, h),
            const(h, h), const(1, h),
            const(h, h), const(1, h),
            const(h, d), const(1, d),
            const(1, d), const(1, d),
        ],
        out_specs=row(d),
        compiler_params=pltpu.CompilerParams(
            dimension_semantics=("parallel",)),
    )(vel, vmean, vinvstd, pos, lo, hi, emb, agg, last, prev,
      wv, wlo, whi, wemb, wagg, b1, w2, b2, wd, bd, amean, astd)


# ----------------------------------------------------------------------------
# host-side connectivity (mirrors the `.cpu().numpy()` radius search)
# ----------------------------------------------------------------------------
def _compute_connectivity(positions, n_node, radius, tile_e):
    """Per-example radius graph (self-edges included), bucketed to tile_e."""
    senders_list, receivers_list = [], []
    offset = 0
    for n in np.asarray(n_node):
        n = int(n)
        pos = positions[offset:offset + n]
        d2 = ((pos[:, None, :] - pos[None, :, :]) ** 2).sum(-1)
        s, r = np.nonzero(d2 <= radius * radius)
        senders_list.append((s + offset).astype(np.int32))
        receivers_list.append((r + offset).astype(np.int32))
        offset += n
    senders = np.concatenate(senders_list)
    receivers = np.concatenate(receivers_list)
    e = int(senders.shape[0])
    # Static bucket sized from the actual edge count (rounded up to the edge
    # tile) instead of N^2 — keeps all edge-side work O(E).
    e_pad = max(tile_e, _round_up(e, tile_e))
    senders = np.pad(senders, (0, e_pad - e))
    receivers = np.pad(receivers, (0, e_pad - e))
    return senders, receivers, e, e_pad


# ----------------------------------------------------------------------------
# LearnedSimulator (Pallas)
# ----------------------------------------------------------------------------
class LearnedSimulatorPallas:
    def __init__(self, num_dimensions, connectivity_radius, boundaries,
                 normalization_stats, num_particle_types,
                 particle_type_embedding_size, latent_size=32, seed=0):
        D = num_dimensions
        self._num_dimensions = D
        self._connectivity_radius = float(connectivity_radius)
        self._inv_radius = 1.0 / float(connectivity_radius)
        self._boundaries = jnp.asarray(boundaries, jnp.float32)     # [D, 2]
        self._normalization_stats = normalization_stats
        self._num_particle_types = num_particle_types
        self._node_input_size = (INPUT_SEQUENCE_LENGTH + 1) * D
        self._edge_input_size = D + 1
        H = latent_size
        self._latent_size = H

        key = jax.random.PRNGKey(seed)
        keys = jax.random.split(key, 12)

        if num_particle_types > 1:
            self._emb_size = particle_type_embedding_size
            self._particle_type_embedding = 0.1 * jax.random.normal(
                keys[0], (num_particle_types, particle_type_embedding_size),
                jnp.float32)
            self._node_input_size += particle_type_embedding_size
        else:
            self._emb_size = 1
            self._particle_type_embedding = None

        # TODO(synk): the reference `EncodeProcessDecode` definition was not
        # provided; using a deterministic encode -> aggregate -> decode MLP
        # stand-in with the correct node/edge input sizes and output size.
        def init(k, shape):
            return (jax.random.normal(k, shape, jnp.float32)
                    / jnp.sqrt(jnp.float32(shape[0])))

        F = (INPUT_SEQUENCE_LENGTH - 1) * D      # flattened velocity features
        # edge MLP, first layer split by feature group: displacement | distance
        self._We1_disp = init(keys[1], (D, H))
        self._we1_dist = init(keys[2], (1, H))
        self._be1 = jnp.zeros((1, H), jnp.float32)
        self._We2 = init(keys[3], (H, H))
        self._be2 = jnp.zeros((1, H), jnp.float32)
        # node MLP, first layer split by group: vel | dist_lo | dist_hi | emb | agg
        self._Wn1_v = init(keys[4], (F, H))
        self._Wn1_lo = init(keys[5], (D, H))
        self._Wn1_hi = init(keys[6], (D, H))
        self._Wn1_emb = init(keys[7], (self._emb_size, H))
        self._Wn1_agg = init(keys[8], (H, H))
        self._bn1 = jnp.zeros((1, H), jnp.float32)
        self._Wn2 = init(keys[9], (H, H))
        self._bn2 = jnp.zeros((1, H), jnp.float32)
        self._Wd = init(keys[10], (H, D))
        self._bd = jnp.zeros((1, D), jnp.float32)

    def __call__(self, position_sequence, n_particles_per_example,
                 global_context=None, particle_types=None):
        N, S, D = position_sequence.shape
        most_recent_position = position_sequence[:, -1]                  # [N, D]
        previous_position = position_sequence[:, -2]
        velocity_sequence = position_sequence[:, 1:] - position_sequence[:, :-1]
        F = (S - 1) * D
        vel_flat = velocity_sequence.reshape(N, F)

        # padding / tiling geometry
        tile_n = min(MAX_TILE_N, _round_up(N, 8))
        n_pad = _round_up(N, tile_n)

        # connectivity (host side; static bucket = multiple of TILE_E)
        senders, receivers, num_edges, e_pad = _compute_connectivity(
            np.asarray(most_recent_position),
            np.asarray(n_particles_per_example),
            self._connectivity_radius, TILE_E)
        senders = jnp.asarray(senders)
        receivers = jnp.asarray(receivers)
        # receivers used by the in-kernel one-hot: padded edges point past the
        # last (padded) node so they never match -> masked for free
        recv_oh = jnp.where(jnp.arange(e_pad) < num_edges,
                            receivers, n_pad).astype(jnp.int32).reshape(1, e_pad)

        # normalization statistics (reciprocals precomputed; std guarded)
        vstats = self._normalization_stats['velocity']
        vmean = jnp.tile(jnp.asarray(vstats['mean'], jnp.float32),
                         S - 1).reshape(1, F)
        vstd = jnp.tile(jnp.asarray(vstats['std'], jnp.float32),
                        S - 1).reshape(1, F)
        vinvstd = 1.0 / jnp.maximum(vstd, STD_EPSILON)
        astats = self._normalization_stats['acceleration']
        amean = jnp.asarray(astats['mean'], jnp.float32).reshape(1, D)
        astd = jnp.asarray(astats['std'], jnp.float32).reshape(1, D)
        lo = self._boundaries[:, 0].reshape(1, D)
        hi = self._boundaries[:, 1].reshape(1, D)

        if global_context is not None:
            cstats = self._normalization_stats['context']
            global_context = ((global_context - cstats['mean'])
                              / max(cstats['std'], STD_EPSILON))
            # TODO(synk): graph-network stand-in does not consume global context.

        # edge pipeline: features + 2-layer edge MLP + one-hot scatter-add,
        # fully fused; edge latents never leave VMEM
        spos = jnp.take(most_recent_position, senders, axis=0)          # [E_pad, D]
        rpos = jnp.take(most_recent_position, receivers, axis=0)        # [E_pad, D]
        agg = edge_aggregate(recv_oh, spos, rpos,
                             self._We1_disp, self._we1_dist, self._be1,
                             self._We2, self._be2,
                             n_pad=n_pad, inv_radius=self._inv_radius)  # [n_pad, H]

        # particle-type embedding gather (tiny; plain XLA gather)
        if self._num_particle_types > 1:
            emb = jnp.take(self._particle_type_embedding, particle_types, axis=0)
        else:
            emb = jnp.zeros((N, self._emb_size), jnp.float32)

        # node pipeline: preprocessor + node MLP + decoder postprocessor,
        # fused into one row-tiled kernel
        def pad_rows(x):
            return jnp.pad(x, ((0, n_pad - N), (0, 0)))

        next_position = node_pipeline(
            pad_rows(vel_flat), vmean, vinvstd,
            pad_rows(most_recent_position), lo, hi,
            pad_rows(emb), agg,
            pad_rows(most_recent_position), pad_rows(previous_position),
            self._Wn1_v, self._Wn1_lo, self._Wn1_hi, self._Wn1_emb,
            self._Wn1_agg, self._bn1, self._Wn2, self._bn2,
            self._Wd, self._bd, amean, astd,
            inv_radius=self._inv_radius, tile_n=tile_n)
        return next_position[:N]


# ----------------------------------------------------------------------------
# main
# ----------------------------------------------------------------------------
if __name__ == "__main__":
    key = jax.random.PRNGKey(0)
    N = 64                       # particles
    D = 2                        # num_dimensions
    NUM_PARTICLE_TYPES = 9
    EMB_SIZE = 16

    k1, k2, k3 = jax.random.split(key, 3)
    base = jax.random.uniform(k1, (N, 1, D), minval=0.1, maxval=0.9)
    steps = 0.005 * jax.random.normal(k2, (N, INPUT_SEQUENCE_LENGTH, D))
    position_sequence = (base + jnp.cumsum(steps, axis=1)).astype(jnp.float32)
    particle_types = jax.random.randint(k3, (N,), 0, NUM_PARTICLE_TYPES)
    n_particles_per_example = jnp.array([N], jnp.int32)

    normalization_stats = {
        'velocity': {'mean': [0.0, 0.0], 'std': [0.01, 0.01]},
        'acceleration': {'mean': [0.0, 0.0], 'std': [0.001, 0.001]},
    }
    boundaries = [(0.0, 1.0), (0.0, 1.0)]

    sim = LearnedSimulatorPallas(
        num_dimensions=D,
        connectivity_radius=0.25,
        boundaries=boundaries,
        normalization_stats=normalization_stats,
        num_particle_types=NUM_PARTICLE_TYPES,
        particle_type_embedding_size=EMB_SIZE,
        latent_size=32,
        seed=0)

    next_position = sim(position_sequence, n_particles_per_example,
                        global_context=None, particle_types=particle_types)
    next_position = jax.block_until_ready(next_position)

    assert next_position.shape == (N, D)
    assert bool(jnp.all(jnp.isfinite(next_position)))
    print("KERNEL_OK")
</pallas_src>

<mosaic_0001>
module attributes {stable_mosaic.version = 11 : i64} {
  func.func @_edge_agg_kernel(%arg0: i32, %arg1: memref<1x512xi32, #tpu.memory_space<vmem>>, %arg2: memref<512x2xf32, #tpu.memory_space<vmem>>, %arg3: memref<512x2xf32, #tpu.memory_space<vmem>>, %arg4: memref<2x32xf32, #tpu.memory_space<vmem>>, %arg5: memref<1x32xf32, #tpu.memory_space<vmem>>, %arg6: memref<1x32xf32, #tpu.memory_space<vmem>>, %arg7: memref<32x32xf32, #tpu.memory_space<vmem>>, %arg8: memref<1x32xf32, #tpu.memory_space<vmem>>, %arg9: memref<64x32xf32, #tpu.memory_space<vmem>>) attributes {dimension_semantics = [#tpu.dimension_semantics<arbitrary>], iteration_bounds = array<i64: 2>, scalar_prefetch = 0 : i64, scratch_operands = 0 : i64, tpu.core_type = #tpu.core_type<tc>, window_params = [{transform_indices = @transform_0, window_bounds = array<i64: 1, 512>}, {transform_indices = @transform_1, window_bounds = array<i64: 512, 2>}, {transform_indices = @transform_2, window_bounds = array<i64: 512, 2>}, {pipeline_mode = #tpu.pipeline_mode<synchronous>, transform_indices = @transform_3, window_bounds = array<i64: 2, 32>}, {pipeline_mode = #tpu.pipeline_mode<synchronous>, transform_indices = @transform_4, window_bounds = array<i64: 1, 32>}, {pipeline_mode = #tpu.pipeline_mode<synchronous>, transform_indices = @transform_5, window_bounds = array<i64: 1, 32>}, {pipeline_mode = #tpu.pipeline_mode<synchronous>, transform_indices = @transform_6, window_bounds = array<i64: 32, 32>}, {pipeline_mode = #tpu.pipeline_mode<synchronous>, transform_indices = @transform_7, window_bounds = array<i64: 1, 32>}, {pipeline_mode = #tpu.pipeline_mode<synchronous>, transform_indices = @transform_8, window_bounds = array<i64: 64, 32>}]} {
    %c0_i32 = arith.constant 0 : i32
    %0 = arith.cmpi eq, %arg0, %c0_i32 : i32
    %1 = arith.extui %0 : i1 to i32
    %c0_i32_0 = arith.constant 0 : i32
    %2 = arith.cmpi ne, %1, %c0_i32_0 : i32
    scf.if %2 {
      %cst_26 = arith.constant 0.000000e+00 : f32
      %41 = vector.broadcast %cst_26 : f32 to vector<64x32xf32>
      %c0_27 = arith.constant 0 : index
      %c0_28 = arith.constant 0 : index
      %42 = vector.load %arg9[%c0_27, %c0_28] : memref<64x32xf32, #tpu.memory_space<vmem>>, vector<64x32xf32>
      tpu.vector_store %arg9[%c0_27, %c0_28], %41 {strides = array<i32>} : memref<64x32xf32, #tpu.memory_space<vmem>>, vector<64x32xf32>,
    } else {
    }
    %c0 = arith.constant 0 : index
    %c0_1 = arith.constant 0 : index
    %3 = vector.load %arg2[%c0, %c0_1] : memref<512x2xf32, #tpu.memory_space<vmem>>, vector<512x2xf32>
    %c0_2 = arith.constant 0 : index
    %c0_3 = arith.constant 0 : index
    %4 = vector.load %arg3[%c0_2, %c0_3] : memref<512x2xf32, #tpu.memory_space<vmem>>, vector<512x2xf32>
    %5 = arith.subf %3, %4 : vector<512x2xf32>
    %cst = arith.constant 4.000000e+00 : f32
    %6 = vector.broadcast %cst : f32 to vector<512x2xf32>
    %7 = arith.mulf %5, %6 : vector<512x2xf32>
    %8 = arith.mulf %7, %7 : vector<512x2xf32>
    %cst_4 = arith.constant dense<0.000000e+00> : vector<512xf32>
    %9 = vector.multi_reduction <add>, %8, %cst_4 [1] : vector<512x2xf32> to vector<512xf32>
    %10 = vector.shape_cast %9 : vector<512xf32> to vector<512x1xf32>
    %11 = math.sqrt %10 : vector<512x1xf32>
    %c0_5 = arith.constant 0 : index
    %c0_6 = arith.constant 0 : index
    %12 = vector.load %arg4[%c0_5, %c0_6] : memref<2x32xf32, #tpu.memory_space<vmem>>, vector<2x32xf32>
    %cst_7 = arith.constant dense<0.000000e+00> : vector<512x32xf32>
    %13 = tpu.matmul %7, %12, %cst_7 {dimension_numbers = #tpu.dot_dimension_numbers<[1], [0], [0], [1], [0, 0, 1, 1], [], []>} : vector<512x2xf32>, vector<2x32xf32>, vector<512x32xf32> -> vector<512x32xf32>
    %c0_8 = arith.constant 0 : index
    %c0_9 = arith.constant 0 : index
    %14 = vector.load %arg5[%c0_8, %c0_9] : memref<1x32xf32, #tpu.memory_space<vmem>>, vector<1x32xf32>
    %15 = vector.broadcast %11 : vector<512x1xf32> to vector<512x32xf32>
    %16 = vector.broadcast %14 : vector<1x32xf32> to vector<512x32xf32>
    %17 = arith.mulf %15, %16 : vector<512x32xf32>
    %18 = arith.addf %13, %17 : vector<512x32xf32>
    %c0_10 = arith.constant 0 : index
    %c0_11 = arith.constant 0 : index
    %19 = vector.load %arg6[%c0_10, %c0_11] : memref<1x32xf32, #tpu.memory_space<vmem>>, vector<1x32xf32>
    %20 = vector.broadcast %19 : vector<1x32xf32> to vector<512x32xf32>
    %21 = arith.addf %18, %20 : vector<512x32xf32>
    %cst_12 = arith.constant 0.000000e+00 : f32
    %22 = vector.broadcast %cst_12 : f32 to vector<512x32xf32>
    %23 = arith.maximumf %21, %22 : vector<512x32xf32>
    %c0_13 = arith.constant 0 : index
    %c0_14 = arith.constant 0 : index
    %24 = vector.load %arg7[%c0_13, %c0_14] : memref<32x32xf32, #tpu.memory_space<vmem>>, vector<32x32xf32>
    %cst_15 = arith.constant dense<0.000000e+00> : vector<512x32xf32>
    %25 = tpu.matmul %23, %24, %cst_15 {dimension_numbers = #tpu.dot_dimension_numbers<[1], [0], [0], [1], [0, 0, 1, 1], [], []>} : vector<512x32xf32>, vector<32x32xf32>, vector<512x32xf32> -> vector<512x32xf32>
    %c0_16 = arith.constant 0 : index
    %c0_17 = arith.constant 0 : index
    %26 = vector.load %arg8[%c0_16, %c0_17] : memref<1x32xf32, #tpu.memory_space<vmem>>, vector<1x32xf32>
    %27 = vector.broadcast %26 : vector<1x32xf32> to vector<512x32xf32>
    %28 = arith.addf %25, %27 : vector<512x32xf32>
    %cst_18 = arith.constant 0.000000e+00 : f32
    %29 = vector.broadcast %cst_18 : f32 to vector<512x32xf32>
    %30 = arith.maximumf %28, %29 : vector<512x32xf32>
    %31 = tpu.iota {dimensions = array<i32: 0>} : vector<64x512xi32>
    %c0_19 = arith.constant 0 : index
    %c0_20 = arith.constant 0 : index
    %32 = vector.load %arg1[%c0_19, %c0_20] : memref<1x512xi32, #tpu.memory_space<vmem>>, vector<1x512xi32>
    %33 = vector.broadcast %32 : vector<1x512xi32> to vector<64x512xi32>
    %34 = arith.cmpi eq, %31, %33 : vector<64x512xi32>
    %35 = arith.extui %34 : vector<64x512xi1> to vector<64x512xi32>
    %36 = arith.sitofp %35 : vector<64x512xi32> to vector<64x512xf32>
    %c0_21 = arith.constant 0 : index
    %c0_22 = arith.constant 0 : index
    %37 = vector.load %arg9[%c0_21, %c0_22] : memref<64x32xf32, #tpu.memory_space<vmem>>, vector<64x32xf32>
    %cst_23 = arith.constant dense<0.000000e+00> : vector<64x32xf32>
    %38 = tpu.matmul %36, %30, %cst_23 {dimension_numbers = #tpu.dot_dimension_numbers<[1], [0], [0], [1], [0, 0, 1, 1], [], []>} : vector<64x512xf32>, vector<512x32xf32>, vector<64x32xf32> -> vector<64x32xf32>
    %39 = arith.addf %37, %38 : vector<64x32xf32>
    %c0_24 = arith.constant 0 : index
    %c0_25 = arith.constant 0 : index
    %40 = vector.load %arg9[%c0_24, %c0_25] : memref<64x32xf32, #tpu.memory_space<vmem>>, vector<64x32xf32>
    tpu.vector_store %arg9[%c0_24, %c0_25], %39 {strides = array<i32>} : memref<64x32xf32, #tpu.memory_space<vmem>>, vector<64x32xf32>,
    return
  }
  func.func @transform_0(%arg0: i32) -> (i32, i32) {
    %c0_i32 = arith.constant 0 : i32
    %c0_i32_0 = arith.constant 0 : i32
    return %c0_i32, %arg0 : i32, i32
  }
  func.func @transform_1(%arg0: i32) -> (i32, i32) {
    %c0_i32 = arith.constant 0 : i32
    %c0_i32_0 = arith.constant 0 : i32
    return %arg0, %c0_i32 : i32, i32
  }
  func.func @transform_2(%arg0: i32) -> (i32, i32) {
    %c0_i32 = arith.constant 0 : i32
    %c0_i32_0 = arith.constant 0 : i32
    return %arg0, %c0_i32 : i32, i32
  }
  func.func @transform_3(%arg0: i32) -> (i32, i32) {
    %c0_i32 = arith.constant 0 : i32
    %c0_i32_0 = arith.constant 0 : i32
    %c0_i32_1 = arith.constant 0 : i32
    return %c0_i32, %c0_i32_0 : i32, i32
  }
  func.func @transform_4(%arg0: i32) -> (i32, i32) {
    %c0_i32 = arith.constant 0 : i32
    %c0_i32_0 = arith.constant 0 : i32
    %c0_i32_1 = arith.constant 0 : i32
    return %c0_i32, %c0_i32_0 : i32, i32
  }
  func.func @transform_5(%arg0: i32) -> (i32, i32) {
    %c0_i32 = arith.constant 0 : i32
    %c0_i32_0 = arith.constant 0 : i32
    %c0_i32_1 = arith.constant 0 : i32
    return %c0_i32, %c0_i32_0 : i32, i32
  }
  func.func @transform_6(%arg0: i32) -> (i32, i32) {
    %c0_i32 = arith.constant 0 : i32
    %c0_i32_0 = arith.constant 0 : i32
    %c0_i32_1 = arith.constant 0 : i32
    return %c0_i32, %c0_i32_0 : i32, i32
  }
  func.func @transform_7(%arg0: i32) -> (i32, i32) {
    %c0_i32 = arith.constant 0 : i32
    %c0_i32_0 = arith.constant 0 : i32
    %c0_i32_1 = arith.constant 0 : i32
    return %c0_i32, %c0_i32_0 : i32, i32
  }
  func.func @transform_8(%arg0: i32) -> (i32, i32) {
    %c0_i32 = arith.constant 0 : i32
    %c0_i32_0 = arith.constant 0 : i32
    %c0_i32_1 = arith.constant 0 : i32
    return %c0_i32, %c0_i32_0 : i32, i32
  }
}

</mosaic_0001>

<llo_original>
// kernel: tpu_custom_call.1
$region0: #{tpu_custom_call.1}
  #allocation0 [shape = 'u32[]', space=smem, size = 0x4, offset = 0x4, fixed_abs, tag = 'smem constant byte address 0x4 - core index']
  #allocation1 [shape = 'u32[72,128]{1,0:T(1,128)}', space=vmem, size = 0x9000, scoped, tag = 'internal scratch']
  %s0 = inlined_call_operand.vmem [shape: s32[1,1024], index: 0, kind: input, shape index: {}]
  %s1 = inlined_call_operand.vmem [shape: f32[1024,2], index: 1, kind: input, shape index: {}]
  %s2 = inlined_call_operand.vmem [shape: f32[1024,2], index: 2, kind: input, shape index: {}]
  %s3 = inlined_call_operand.vmem [shape: f32[2,32], index: 3, kind: input, shape index: {}]
  %s4 = inlined_call_operand.vmem [shape: f32[1,32], index: 4, kind: input, shape index: {}]
  %s5 = inlined_call_operand.vmem [shape: f32[1,32], index: 5, kind: input, shape index: {}]
  %s6 = inlined_call_operand.vmem [shape: f32[32,32], index: 6, kind: input, shape index: {}]
  %s7 = inlined_call_operand.vmem [shape: f32[1,32], index: 7, kind: input, shape index: {}]
  %s8 = inlined_call_operand.vmem [shape: f32[64,32], index: 8, kind: output, shape index: {}]
  %s9 = sld [smem:[#allocation0]]
  $region69: #{tpu_custom_call.1} parent=0
    _
  %s11 = ssub.s32 1, %s9
  %s12 = scalar_select 0, %s11, %s9
  loop: start=0, step=1, limit=4
  $region2: #{tpu_custom_call.1} parent=0 // loop_pre_header
    _
  $region3: #{tpu_custom_call.1} parent=0 // loop_header
    %s14 = sphi 0, %s18
    %p15 = scmp.ge.s32.totalorder %s14, 4
    %s24 = sphi 0, %s26
    %s27 = sphi 0, %s24
    %s28 = sphi 0, %s27
    %s44 = sphi 0, %s28
    %s50 = sphi 0, %s52
    %s53 = sphi 0, %s50
    %s54 = sphi 0, %s53
    %s70 = sphi 0, %s54
    %s76 = sphi 0, %s78
    %s79 = sphi 0, %s76
    %s80 = sphi 0, %s79
    %s96 = sphi 0, %s80
    %s100 = sphi 0, %s100
    %s102 = sphi 0, %s100
    %s103 = sphi 0, %s102
    %s117 = sphi 0, %s103
    %s121 = sphi 0, %s121
    %s123 = sphi 0, %s121
    %s124 = sphi 0, %s123
    %s138 = sphi 0, %s124
    %s142 = sphi 0, %s142
    %s144 = sphi 0, %s142
    %s145 = sphi 0, %s144
    %s159 = sphi 0, %s145
    %s163 = sphi 0, %s163
    %s165 = sphi 0, %s163
    %s166 = sphi 0, %s165
    %s180 = sphi 0, %s166
    %s184 = sphi 0, %s184
    %s186 = sphi 0, %s184
    %s187 = sphi 0, %s186
    %s201 = sphi 0, %s187
    %s205 = sphi 0, %s205
    %s207 = sphi 0, %s205
    %s208 = sphi 0, %s207
    %s222 = sphi 0, %s208
  $region4: #{tpu_custom_call.1} parent=0 // loop_header_branch
    %17 = sbr.rel (%p15) target = $region8
  $region5: #{tpu_custom_call.1} parent=0 // loop_body
    %s19 = ssub.s32 %s14, 1
    %s20 = ssub.s32 %s14, 2
    %s21 = sadd.s32 %s14, 1
    %s22 = ssub.s32 %s14, %s21
    %p23 = scmp.eq.s32.totalorder %s22, 0
    %s25 = sadd.s32 %s24, 1
    %s26 = scalar_select %p23, %s24, %s25
    %p29 = pneg %p23
    %p30 = scmp.eq.s32.totalorder %s14, 1
    %p31 = por %p29, %p30
    %p32 = scmp.ne.s32.totalorder %s24, %s27
    %p33 = scmp.eq.s32.totalorder %s14, 0
    %p34 = por %p32, %p33
    %p35 = scmp.ne.s32.totalorder %s24, %s27
    %p36 = scmp.eq.s32.totalorder %s19, 1
    %p37 = por %p35, %p36
    %p38 = scmp.ne.s32.totalorder %s27, %s28
    %p39 = scmp.eq.s32.totalorder %s19, 0
    %p40 = por %p38, %p39
    %p41 = scmp.ne.s32.totalorder %s27, %s28
    %p42 = scmp.eq.s32.totalorder %s20, 1
    %p43 = por %p41, %p42
    %p45 = scmp.ne.s32.totalorder %s28, %s44
    %p46 = scmp.eq.s32.totalorder %s20, 0
    %p47 = por %p45, %p46
    %s48 = ssub.s32 %s14, %s21
    %p49 = scmp.eq.s32.totalorder %s48, 0
    %s51 = sadd.s32 %s50, 1
    %s52 = scalar_select %p49, %s50, %s51
    %p55 = pneg %p49
    %p56 = scmp.eq.s32.totalorder %s14, 1
    %p57 = por %p55, %p56
    %p58 = scmp.ne.s32.totalorder %s50, %s53
    %p59 = scmp.eq.s32.totalorder %s14, 0
    %p60 = por %p58, %p59
    %p61 = scmp.ne.s32.totalorder %s50, %s53
    %p62 = scmp.eq.s32.totalorder %s19, 1
    %p63 = por %p61, %p62
    %p64 = scmp.ne.s32.totalorder %s53, %s54
    %p65 = scmp.eq.s32.totalorder %s19, 0
    %p66 = por %p64, %p65
    %p67 = scmp.ne.s32.totalorder %s53, %s54
    %p68 = scmp.eq.s32.totalorder %s20, 1
    %p69 = por %p67, %p68
    %p71 = scmp.ne.s32.totalorder %s54, %s70
    %p72 = scmp.eq.s32.totalorder %s20, 0
    %p73 = por %p71, %p72
    %s74 = ssub.s32 %s14, %s21
    %p75 = scmp.eq.s32.totalorder %s74, 0
    %s77 = sadd.s32 %s76, 1
    %s78 = scalar_select %p75, %s76, %s77
    %p81 = pneg %p75
    %p82 = scmp.eq.s32.totalorder %s14, 1
    %p83 = por %p81, %p82
    %p84 = scmp.ne.s32.totalorder %s76, %s79
    %p85 = scmp.eq.s32.totalorder %s14, 0
    %p86 = por %p84, %p85
    %p87 = scmp.ne.s32.totalorder %s76, %s79
    %p88 = scmp.eq.s32.totalorder %s19, 1
    %p89 = por %p87, %p88
    %p90 = scmp.ne.s32.totalorder %s79, %s80
    %p91 = scmp.eq.s32.totalorder %s19, 0
    %p92 = por %p90, %p91
    %p93 = scmp.ne.s32.totalorder %s79, %s80
    %p94 = scmp.eq.s32.totalorder %s20, 1
    %p95 = por %p93, %p94
    %p97 = scmp.ne.s32.totalorder %s80, %s96
    %p98 = scmp.eq.s32.totalorder %s20, 0
    %p99 = por %p97, %p98
    %s101 = sadd.s32 %s100, 1
    %p104 = scmp.eq.s32.totalorder %s14, 1
    %p105 = scmp.ne.s32.totalorder %s100, %s102
    %p106 = scmp.eq.s32.totalorder %s14, 0
    %p107 = por %p105, %p106
    %p108 = scmp.ne.s32.totalorder %s100, %s102
    %p109 = scmp.eq.s32.totalorder %s19, 1
    %p110 = por %p108, %p109
    %p111 = scmp.ne.s32.totalorder %s102, %s103
    %p112 = scmp.eq.s32.totalorder %s19, 0
    %p113 = por %p111, %p112
    %p114 = scmp.ne.s32.totalorder %s102, %s103
    %p115 = scmp.eq.s32.totalorder %s20, 1
    %p116 = por %p114, %p115
    %p118 = scmp.ne.s32.totalorder %s103, %s117
    %p119 = scmp.eq.s32.totalorder %s20, 0
    %p120 = por %p118, %p119
    %s122 = sadd.s32 %s121, 1
    %p125 = scmp.eq.s32.totalorder %s14, 1
    %p126 = scmp.ne.s32.totalorder %s121, %s123
    %p127 = scmp.eq.s32.totalorder %s14, 0
    %p128 = por %p126, %p127
    %p129 = scmp.ne.s32.totalorder %s121, %s123
    %p130 = scmp.eq.s32.totalorder %s19, 1
    %p131 = por %p129, %p130
    %p132 = scmp.ne.s32.totalorder %s123, %s124
    %p133 = scmp.eq.s32.totalorder %s19, 0
    %p134 = por %p132, %p133
    %p135 = scmp.ne.s32.totalorder %s123, %s124
    %p136 = scmp.eq.s32.totalorder %s20, 1
    %p137 = por %p135, %p136
    %p139 = scmp.ne.s32.totalorder %s124, %s138
    %p140 = scmp.eq.s32.totalorder %s20, 0
    %p141 = por %p139, %p140
    %s143 = sadd.s32 %s142, 1
    %p146 = scmp.eq.s32.totalorder %s14, 1
    %p147 = scmp.ne.s32.totalorder %s142, %s144
    %p148 = scmp.eq.s32.totalorder %s14, 0
    %p149 = por %p147, %p148
    %p150 = scmp.ne.s32.totalorder %s142, %s144
    %p151 = scmp.eq.s32.totalorder %s19, 1
    %p152 = por %p150, %p151
    %p153 = scmp.ne.s32.totalorder %s144, %s145
    %p154 = scmp.eq.s32.totalorder %s19, 0
    %p155 = por %p153, %p154
    %p156 = scmp.ne.s32.totalorder %s144, %s145
    %p157 = scmp.eq.s32.totalorder %s20, 1
    %p158 = por %p156, %p157
    %p160 = scmp.ne.s32.totalorder %s145, %s159
    %p161 = scmp.eq.s32.totalorder %s20, 0
    %p162 = por %p160, %p161
    %s164 = sadd.s32 %s163, 1
    %p167 = scmp.eq.s32.totalorder %s14, 1
    %p168 = scmp.ne.s32.totalorder %s163, %s165
    %p169 = scmp.eq.s32.totalorder %s14, 0
    %p170 = por %p168, %p169
    %p171 = scmp.ne.s32.totalorder %s163, %s165
    %p172 = scmp.eq.s32.totalorder %s19, 1
    %p173 = por %p171, %p172
    %p174 = scmp.ne.s32.totalorder %s165, %s166
    %p175 = scmp.eq.s32.totalorder %s19, 0
    %p176 = por %p174, %p175
    %p177 = scmp.ne.s32.totalorder %s165, %s166
    %p178 = scmp.eq.s32.totalorder %s20, 1
    %p179 = por %p177, %p178
    %p181 = scmp.ne.s32.totalorder %s166, %s180
    %p182 = scmp.eq.s32.totalorder %s20, 0
    %p183 = por %p181, %p182
    %s185 = sadd.s32 %s184, 1
    %p188 = scmp.eq.s32.totalorder %s14, 1
    %p189 = scmp.ne.s32.totalorder %s184, %s186
    %p190 = scmp.eq.s32.totalorder %s14, 0
    %p191 = por %p189, %p190
    %p192 = scmp.ne.s32.totalorder %s184, %s186
    %p193 = scmp.eq.s32.totalorder %s19, 1
    %p194 = por %p192, %p193
    %p195 = scmp.ne.s32.totalorder %s186, %s187
    %p196 = scmp.eq.s32.totalorder %s19, 0
    %p197 = por %p195, %p196
    %p198 = scmp.ne.s32.totalorder %s186, %s187
    %p199 = scmp.eq.s32.totalorder %s20, 1
    %p200 = por %p198, %p199
    %p202 = scmp.ne.s32.totalorder %s187, %s201
    %p203 = scmp.eq.s32.totalorder %s20, 0
    %p204 = por %p202, %p203
    %s206 = sadd.s32 %s205, 1
    %p209 = scmp.eq.s32.totalorder %s14, 1
    %p210 = scmp.ne.s32.totalorder %s205, %s207
    %p211 = scmp.eq.s32.totalorder %s14, 0
    %p212 = por %p210, %p211
    %p213 = scmp.ne.s32.totalorder %s205, %s207
    %p214 = scmp.eq.s32.totalorder %s19, 1
    %p215 = por %p213, %p214
    %p216 = scmp.ne.s32.totalorder %s207, %s208
    %p217 = scmp.eq.s32.totalorder %s19, 0
    %p218 = por %p216, %p217
    %p219 = scmp.ne.s32.totalorder %s207, %s208
    %p220 = scmp.eq.s32.totalorder %s20, 1
    %p221 = por %p219, %p220
    %p223 = scmp.ne.s32.totalorder %s208, %s222
    %p224 = scmp.eq.s32.totalorder %s20, 0
    %p225 = por %p223, %p224
    %p226 = scmp.le.s32.totalorder 1, %s14
    %p227 = scmp.lt.s32.totalorder %s14, 3
    %p228 = pnand %p226, %p227
    %p229 = pneg %p228
    // Predicated region
    $region9: #{tpu_custom_call.1} parent=5 // pred_check
      _
    $region10: #{tpu_custom_call.1} parent=5 // pred_check_branch
      %231 = sbr.rel (%p228) target = $region12
    $region11: #{tpu_custom_call.1} parent=5 // pred_region
      %s232 = ssub.s32 %s14, 1
      // Predicated region
      $region13: #{tpu_custom_call.1} parent=11 // pred_check
        %p233 = pneg %p113
      $region14: #{tpu_custom_call.1} parent=11 // pred_check_branch
        %235 = sbr.rel (%p233) target = $region16
      $region15: #{tpu_custom_call.1} parent=11 // pred_region
        _
      $region16: #{tpu_custom_call.1} parent=11 // pred_fallthru
        _
      // Predicated region
      $region17: #{tpu_custom_call.1} parent=11 // pred_check
        %p236 = pneg %p134
      $region18: #{tpu_custom_call.1} parent=11 // pred_check_branch
        %238 = sbr.rel (%p236) target = $region20
      $region19: #{tpu_custom_call.1} parent=11 // pred_region
        _
      $region20: #{tpu_custom_call.1} parent=11 // pred_fallthru
        _
      // Predicated region
      $region21: #{tpu_custom_call.1} parent=11 // pred_check
        %p239 = pneg %p155
      $region22: #{tpu_custom_call.1} parent=11 // pred_check_branch
        %241 = sbr.rel (%p239) target = $region24
      $region23: #{tpu_custom_call.1} parent=11 // pred_region
        _
      $region24: #{tpu_custom_call.1} parent=11 // pred_fallthru
        _
      // Predicated region
      $region25: #{tpu_custom_call.1} parent=11 // pred_check
        %p242 = pneg %p176
      $region26: #{tpu_custom_call.1} parent=11 // pred_check_branch
        %244 = sbr.rel (%p242) target = $region28
      $region27: #{tpu_custom_call.1} parent=11 // pred_region
        _
      $region28: #{tpu_custom_call.1} parent=11 // pred_fallthru
        _
      // Predicated region
      $region29: #{tpu_custom_call.1} parent=11 // pred_check
        %p245 = pneg %p197
      $region30: #{tpu_custom_call.1} parent=11 // pred_check_branch
        %247 = sbr.rel (%p245) target = $region32
      $region31: #{tpu_custom_call.1} parent=11 // pred_region
        _
      $region32: #{tpu_custom_call.1} parent=11 // pred_fallthru
        _
    $region12: #{tpu_custom_call.1} parent=5 // pred_fallthru
      _
    %p248 = scmp.lt.s32.totalorder %s14, 2
    // Predicated region
    $region33: #{tpu_custom_call.1} parent=5 // pred_check
      %p249 = pneg %p248
    $region34: #{tpu_custom_call.1} parent=5 // pred_check_branch
      %251 = sbr.rel (%p249) target = $region36
    $region35: #{tpu_custom_call.1} parent=5 // pred_region
      // Predicated region
      $region37: #{tpu_custom_call.1} parent=35 // pred_check
        %p252 = pneg %p34
      $region38: #{tpu_custom_call.1} parent=35 // pred_check_branch
        %254 = sbr.rel (%p252) target = $region40
      $region39: #{tpu_custom_call.1} parent=35 // pred_region
        %s255 = smul.u32 4, %s14
        %p256 = scmp.lt.s32.totalorder %s255, 7
        %s257 = scalar_select %p256, %s255, 7
        %s258 = scalar_lea.vmem %s0, %s257
        %s259 = smul.u32 4, %s14
      $region40: #{tpu_custom_call.1} parent=35 // pred_fallthru
        _
      // Predicated region
      $region41: #{tpu_custom_call.1} parent=35 // pred_check
        %p260 = pneg %p60
      $region42: #{tpu_custom_call.1} parent=35 // pred_check_branch
        %262 = sbr.rel (%p260) target = $region44
      $region43: #{tpu_custom_call.1} parent=35 // pred_region
        %s263 = smul.u32 64, %s14
        %p264 = scmp.lt.s32.totalorder %s263, 127
        %s265 = scalar_select %p264, %s263, 127
        %s266 = smul.addr %s265, 8
        %s267 = scalar_lea.vmem %s1, %s266
        %s268 = smul.u32 64, %s14
      $region44: #{tpu_custom_call.1} parent=35 // pred_fallthru
        _
      // Predicated region
      $region45: #{tpu_custom_call.1} parent=35 // pred_check
        %p269 = pneg %p86
      $region46: #{tpu_custom_call.1} parent=35 // pred_check_branch
        %271 = sbr.rel (%p269) target = $region48
      $region47: #{tpu_custom_call.1} parent=35 // pred_region
        %s272 = smul.u32 64, %s14
        %p273 = scmp.lt.s32.totalorder %s272, 127
        %s274 = scalar_select %p273, %s272, 127
        %s275 = smul.addr %s274, 8
        %s276 = scalar_lea.vmem %s2, %s275
        %s277 = smul.u32 64, %s14
      $region48: #{tpu_custom_call.1} parent=35 // pred_fallthru
        _
    $region36: #{tpu_custom_call.1} parent=5 // pred_fallthru
      _
    %p278 = scmp.le.s32.totalorder 1, %s14
    %p279 = scmp.lt.s32.totalorder %s14, 3
    %p280 = pnand %p278, %p279
    %p281 = pneg %p280
    // Predicated region
    $region49: #{tpu_custom_call.1} parent=5 // pred_check
      _
    $region50: #{tpu_custom_call.1} parent=5 // pred_check_branch
      %283 = sbr.rel (%p280) target = $region52
    $region51: #{tpu_custom_call.1} parent=5 // pred_region
      %s284 = ssub.s32 %s14, 1
      %s285 = smul.u32 4, %s19
      %p286 = scmp.lt.s32.totalorder %s285, 7
      %s287 = scalar_select %p286, %s285, 7
      %s288 = scalar_lea.vmem %s0, %s287
      %p289 = pneg %p40
      %p290 = pneg %p37
      %s291 = smul.u32 64, %s19
      %p292 = scmp.lt.s32.totalorder %s291, 127
      %s293 = scalar_select %p292, %s291, 127
      %s294 = smul.addr %s293, 8
      %s295 = scalar_lea.vmem %s1, %s294
      %p296 = pneg %p66
      %p297 = pneg %p63
      %s298 = smul.u32 64, %s19
      %p299 = scmp.lt.s32.totalorder %s298, 127
      %s300 = scalar_select %p299, %s298, 127
      %s301 = smul.addr %s300, 8
      %s302 = scalar_lea.vmem %s2, %s301
      %p303 = pneg %p92
      %p304 = pneg %p89
      %p305 = pneg %p113
      %p306 = pneg %p110
      %p307 = pneg %p134
      %p308 = pneg %p131
      %p309 = pneg %p155
      %p310 = pneg %p152
      %p311 = pneg %p176
      %p312 = pneg %p173
      %p313 = pneg %p197
      %p314 = pneg %p194
      %p315 = pneg %p218
      %p316 = pneg %p215
      %s317 = smul.u32 4, %s19
      %p318 = scmp.lt.s32.totalorder %s317, 7
      %s319 = scalar_select %p318, %s317, 7
      %s320 = scalar_lea.vmem %s0, %s319
      %s321 = smul.u32 4, %s19
      %s322 = smul.u32 64, %s19
      %p323 = scmp.lt.s32.totalorder %s322, 127
      %s324 = scalar_select %p323, %s322, 127
      %s325 = smul.addr %s324, 8
      %s326 = scalar_lea.vmem %s1, %s325
      %s327 = smul.u32 64, %s19
      %s328 = smul.u32 64, %s19
      %p329 = scmp.lt.s32.totalorder %s328, 127
      %s330 = scalar_select %p329, %s328, 127
      %s331 = smul.addr %s330, 8
      %s332 = scalar_lea.vmem %s2, %s331
      %s333 = smul.u32 64, %s19
      %p334 = scmp.eq.s32.totalorder %s19, 0
      // Predicated region
      $region53: #{tpu_custom_call.1} parent=51 // pred_check
        %p335 = pneg %p334
      $region54: #{tpu_custom_call.1} parent=51 // pred_check_branch
        %337 = sbr.rel (%p335) target = $region56
      $region55: #{tpu_custom_call.1} parent=51 // pred_region
        %vm338 = vcmask 261120
        %339 = vst.msk [vmem:[%s8] sm:$0xff] %vm338, 0.0
        %340 = vst.msk [vmem:[%s8 + $0x8] sm:$0xff] %vm338, 0.0
        %341 = vst.msk [vmem:[%s8 + $0x10] sm:$0xff] %vm338, 0.0
        %342 = vst.msk [vmem:[%s8 + $0x18] sm:$0xff] %vm338, 0.0
        %343 = vst.msk [vmem:[%s8 + $0x20] sm:$0xff] %vm338, 0.0
        %344 = vst.msk [vmem:[%s8 + $0x28] sm:$0xff] %vm338, 0.0
        %345 = vst.msk [vmem:[%s8 + $0x30] sm:$0xff] %vm338, 0.0
        %346 = vst.msk [vmem:[%s8 + $0x38] sm:$0xff] %vm338, 0.0
      $region56: #{tpu_custom_call.1} parent=51 // pred_fallthru
        _
      %v347 = vld [vmem:[%s326] sm:$0xff]
      %v348 = vld [vmem:[%s326 + $0x8] sm:$0xff]
      %v349 = vld [vmem:[%s326 + $0x10] sm:$0xff]
      %v350 = vld [vmem:[%s326 + $0x18] sm:$0xff]
      %v351 = vld [vmem:[%s326 + $0x20] sm:$0xff]
      %v352 = vld [vmem:[%s326 + $0x28] sm:$0xff]
      %v353 = vld [vmem:[%s326 + $0x30] sm:$0xff]
      %v354 = vld [vmem:[%s326 + $0x38] sm:$0xff]
      %v355 = vld [vmem:[%s326 + $0x40] sm:$0xff]
      %v356 = vld [vmem:[%s326 + $0x48] sm:$0xff]
      %v357 = vld [vmem:[%s326 + $0x50] sm:$0xff]
      %v358 = vld [vmem:[%s326 + $0x58] sm:$0xff]
      %v359 = vld [vmem:[%s326 + $0x60] sm:$0xff]
      %v360 = vld [vmem:[%s326 + $0x68] sm:$0xff]
      %v361 = vld [vmem:[%s326 + $0x70] sm:$0xff]
      %v362 = vld [vmem:[%s326 + $0x78] sm:$0xff]
      %v363 = vld [vmem:[%s326 + $0x80] sm:$0xff]
      %v364 = vld [vmem:[%s326 + $0x88] sm:$0xff]
      %v365 = vld [vmem:[%s326 + $0x90] sm:$0xff]
      %v366 = vld [vmem:[%s326 + $0x98] sm:$0xff]
      %v367 = vld [vmem:[%s326 + $0xa0] sm:$0xff]
      %v368 = vld [vmem:[%s326 + $0xa8] sm:$0xff]
      %v369 = vld [vmem:[%s326 + $0xb0] sm:$0xff]
      %v370 = vld [vmem:[%s326 + $0xb8] sm:$0xff]
      %v371 = vld [vmem:[%s326 + $0xc0] sm:$0xff]
      %v372 = vld [vmem:[%s326 + $0xc8] sm:$0xff]
      %v373 = vld [vmem:[%s326 + $0xd0] sm:$0xff]
      %v374 = vld [vmem:[%s326 + $0xd8] sm:$0xff]
      %v375 = vld [vmem:[%s326 + $0xe0] sm:$0xff]
      %v376 = vld [vmem:[%s326 + $0xe8] sm:$0xff]
      %v377 = vld [vmem:[%s326 + $0xf0] sm:$0xff]
      %v378 = vld [vmem:[%s326 + $0xf8] sm:$0xff]
      %v379 = vld [vmem:[%s326 + $0x100] sm:$0xff]
      %v380 = vld [vmem:[%s326 + $0x108] sm:$0xff]
      %v381 = vld [vmem:[%s326 + $0x110] sm:$0xff]
      %v382 = vld [vmem:[%s326 + $0x118] sm:$0xff]
      %v383 = vld [vmem:[%s326 + $0x120] sm:$0xff]
      %v384 = vld [vmem:[%s326 + $0x128] sm:$0xff]
      %v385 = vld [vmem:[%s326 + $0x130] sm:$0xff]
      %v386 = vld [vmem:[%s326 + $0x138] sm:$0xff]
      %v387 = vld [vmem:[%s326 + $0x140] sm:$0xff]
      %v388 = vld [vmem:[%s326 + $0x148] sm:$0xff]
      %v389 = vld [vmem:[%s326 + $0x150] sm:$0xff]
      %v390 = vld [vmem:[%s326 + $0x158] sm:$0xff]
      %v391 = vld [vmem:[%s326 + $0x160] sm:$0xff]
      %v392 = vld [vmem:[%s326 + $0x168] sm:$0xff]
      %v393 = vld [vmem:[%s326 + $0x170] sm:$0xff]
      %v394 = vld [vmem:[%s326 + $0x178] sm:$0xff]
      %v395 = vld [vmem:[%s326 + $0x180] sm:$0xff]
      %v396 = vld [vmem:[%s326 + $0x188] sm:$0xff]
      %v397 = vld [vmem:[%s326 + $0x190] sm:$0xff]
      %v398 = vld [vmem:[%s326 + $0x198] sm:$0xff]
      %v399 = vld [vmem:[%s326 + $0x1a0] sm:$0xff]
      %v400 = vld [vmem:[%s326 + $0x1a8] sm:$0xff]
      %v401 = vld [vmem:[%s326 + $0x1b0] sm:$0xff]
      %v402 = vld [vmem:[%s326 + $0x1b8] sm:$0xff]
      %v403 = vld [vmem:[%s326 + $0x1c0] sm:$0xff]
      %v404 = vld [vmem:[%s326 + $0x1c8] sm:$0xff]
      %v405 = vld [vmem:[%s326 + $0x1d0] sm:$0xff]
      %v406 = vld [vmem:[%s326 + $0x1d8] sm:$0xff]
      %v407 = vld [vmem:[%s326 + $0x1e0] sm:$0xff]
      %v408 = vld [vmem:[%s326 + $0x1e8] sm:$0xff]
      %v409 = vld [vmem:[%s326 + $0x1f0] sm:$0xff]
      %v410 = vld [vmem:[%s326 + $0x1f8] sm:$0xff]
      %v411 = vld [vmem:[%s332] sm:$0xff]
      %v412 = vld [vmem:[%s332 + $0x8] sm:$0xff]
      %v413 = vld [vmem:[%s332 + $0x10] sm:$0xff]
      %v414 = vld [vmem:[%s332 + $0x18] sm:$0xff]
      %v415 = vld [vmem:[%s332 + $0x20] sm:$0xff]
      %v416 = vld [vmem:[%s332 + $0x28] sm:$0xff]
      %v417 = vld [vmem:[%s332 + $0x30] sm:$0xff]
      %v418 = vld [vmem:[%s332 + $0x38] sm:$0xff]
      %v419 = vld [vmem:[%s332 + $0x40] sm:$0xff]
      %v420 = vld [vmem:[%s332 + $0x48] sm:$0xff]
      %v421 = vld [vmem:[%s332 + $0x50] sm:$0xff]
      %v422 = vld [vmem:[%s332 + $0x58] sm:$0xff]
      %v423 = vld [vmem:[%s332 + $0x60] sm:$0xff]
      %v424 = vld [vmem:[%s332 + $0x68] sm:$0xff]
      %v425 = vld [vmem:[%s332 + $0x70] sm:$0xff]
      %v426 = vld [vmem:[%s332 + $0x78] sm:$0xff]
      %v427 = vld [vmem:[%s332 + $0x80] sm:$0xff]
      %v428 = vld [vmem:[%s332 + $0x88] sm:$0xff]
      %v429 = vld [vmem:[%s332 + $0x90] sm:$0xff]
      %v430 = vld [vmem:[%s332 + $0x98] sm:$0xff]
      %v431 = vld [vmem:[%s332 + $0xa0] sm:$0xff]
      %v432 = vld [vmem:[%s332 + $0xa8] sm:$0xff]
      %v433 = vld [vmem:[%s332 + $0xb0] sm:$0xff]
      %v434 = vld [vmem:[%s332 + $0xb8] sm:$0xff]
      %v435 = vld [vmem:[%s332 + $0xc0] sm:$0xff]
      %v436 = vld [vmem:[%s332 + $0xc8] sm:$0xff]
      %v437 = vld [vmem:[%s332 + $0xd0] sm:$0xff]
      %v438 = vld [vmem:[%s332 + $0xd8] sm:$0xff]
      %v439 = vld [vmem:[%s332 + $0xe0] sm:$0xff]
      %v440 = vld [vmem:[%s332 + $0xe8] sm:$0xff]
      %v441 = vld [vmem:[%s332 + $0xf0] sm:$0xff]
      %v442 = vld [vmem:[%s332 + $0xf8] sm:$0xff]
      %v443 = vld [vmem:[%s332 + $0x100] sm:$0xff]
      %v444 = vld [vmem:[%s332 + $0x108] sm:$0xff]
      %v445 = vld [vmem:[%s332 + $0x110] sm:$0xff]
      %v446 = vld [vmem:[%s332 + $0x118] sm:$0xff]
      %v447 = vld [vmem:[%s332 + $0x120] sm:$0xff]
      %v448 = vld [vmem:[%s332 + $0x128] sm:$0xff]
      %v449 = vld [vmem:[%s332 + $0x130] sm:$0xff]
      %v450 = vld [vmem:[%s332 + $0x138] sm:$0xff]
      %v451 = vld [vmem:[%s332 + $0x140] sm:$0xff]
      %v452 = vld [vmem:[%s332 + $0x148] sm:$0xff]
      %v453 = vld [vmem:[%s332 + $0x150] sm:$0xff]
      %v454 = vld [vmem:[%s332 + $0x158] sm:$0xff]
      %v455 = vld [vmem:[%s332 + $0x160] sm:$0xff]
      %v456 = vld [vmem:[%s332 + $0x168] sm:$0xff]
      %v457 = vld [vmem:[%s332 + $0x170] sm:$0xff]
      %v458 = vld [vmem:[%s332 + $0x178] sm:$0xff]
      %v459 = vld [vmem:[%s332 + $0x180] sm:$0xff]
      %v460 = vld [vmem:[%s332 + $0x188] sm:$0xff]
      %v461 = vld [vmem:[%s332 + $0x190] sm:$0xff]
      %v462 = vld [vmem:[%s332 + $0x198] sm:$0xff]
      %v463 = vld [vmem:[%s332 + $0x1a0] sm:$0xff]
      %v464 = vld [vmem:[%s332 + $0x1a8] sm:$0xff]
      %v465 = vld [vmem:[%s332 + $0x1b0] sm:$0xff]
      %v466 = vld [vmem:[%s332 + $0x1b8] sm:$0xff]
      %v467 = vld [vmem:[%s332 + $0x1c0] sm:$0xff]
      %v468 = vld [vmem:[%s332 + $0x1c8] sm:$0xff]
      %v469 = vld [vmem:[%s332 + $0x1d0] sm:$0xff]
      %v470 = vld [vmem:[%s332 + $0x1d8] sm:$0xff]
      %v471 = vld [vmem:[%s332 + $0x1e0] sm:$0xff]
      %v472 = vld [vmem:[%s332 + $0x1e8] sm:$0xff]
      %v473 = vld [vmem:[%s332 + $0x1f0] sm:$0xff]
      %v474 = vld [vmem:[%s332 + $0x1f8] sm:$0xff]
      %v475 = vsub.f32 %v347, %v411
      %v476 = vsub.f32 %v348, %v412
      %v477 = vsub.f32 %v349, %v413
      %v478 = vsub.f32 %v350, %v414
      %v479 = vsub.f32 %v351, %v415
      %v480 = vsub.f32 %v352, %v416
      %v481 = vsub.f32 %v353, %v417
      %v482 = vsub.f32 %v354, %v418
      %v483 = vsub.f32 %v355, %v419
      %v484 = vsub.f32 %v356, %v420
      %v485 = vsub.f32 %v357, %v421
      %v486 = vsub.f32 %v358, %v422
      %v487 = vsub.f32 %v359, %v423
      %v488 = vsub.f32 %v360, %v424
      %v489 = vsub.f32 %v361, %v425
      %v490 = vsub.f32 %v362, %v426
      %v491 = vsub.f32 %v363, %v427
      %v492 = vsub.f32 %v364, %v428
      %v493 = vsub.f32 %v365, %v429
      %v494 = vsub.f32 %v366, %v430
      %v495 = vsub.f32 %v367, %v431
      %v496 = vsub.f32 %v368, %v432
      %v497 = vsub.f32 %v369, %v433
      %v498 = vsub.f32 %v370, %v434
      %v499 = vsub.f32 %v371, %v435
      %v500 = vsub.f32 %v372, %v436
      %v501 = vsub.f32 %v373, %v437
      %v502 = vsub.f32 %v374, %v438
      %v503 = vsub.f32 %v375, %v439
      %v504 = vsub.f32 %v376, %v440
      %v505 = vsub.f32 %v377, %v441
      %v506 = vsub.f32 %v378, %v442
      %v507 = vsub.f32 %v379, %v443
      %v508 = vsub.f32 %v380, %v444
      %v509 = vsub.f32 %v381, %v445
      %v510 = vsub.f32 %v382, %v446
      %v511 = vsub.f32 %v383, %v447
      %v512 = vsub.f32 %v384, %v448
      %v513 = vsub.f32 %v385, %v449
      %v514 = vsub.f32 %v386, %v450
      %v515 = vsub.f32 %v387, %v451
      %v516 = vsub.f32 %v388, %v452
      %v517 = vsub.f32 %v389, %v453
      %v518 = vsub.f32 %v390, %v454
      %v519 = vsub.f32 %v391, %v455
      %v520 = vsub.f32 %v392, %v456
      %v521 = vsub.f32 %v393, %v457
      %v522 = vsub.f32 %v394, %v458
      %v523 = vsub.f32 %v395, %v459
      %v524 = vsub.f32 %v396, %v460
      %v525 = vsub.f32 %v397, %v461
      %v526 = vsub.f32 %v398, %v462
      %v527 = vsub.f32 %v399, %v463
      %v528 = vsub.f32 %v400, %v464
      %v529 = vsub.f32 %v401, %v465
      %v530 = vsub.f32 %v402, %v466
      %v531 = vsub.f32 %v403, %v467
      %v532 = vsub.f32 %v404, %v468
      %v533 = vsub.f32 %v405, %v469
      %v534 = vsub.f32 %v406, %v470
      %v535 = vsub.f32 %v407, %v471
      %v536 = vsub.f32 %v408, %v472
      %v537 = vsub.f32 %v409, %v473
      %v538 = vsub.f32 %v410, %v474
      %v539 = vmul.f32 %v475, 4.0
      %v540 = vmul.f32 %v476, 4.0
      %v541 = vmul.f32 %v477, 4.0
      %v542 = vmul.f32 %v478, 4.0
      %v543 = vmul.f32 %v479, 4.0
      %v544 = vmul.f32 %v480, 4.0
      %v545 = vmul.f32 %v481, 4.0
      %v546 = vmul.f32 %v482, 4.0
      %v547 = vmul.f32 %v483, 4.0
      %v548 = vmul.f32 %v484, 4.0
      %v549 = vmul.f32 %v485, 4.0
      %v550 = vmul.f32 %v486, 4.0
      %v551 = vmul.f32 %v487, 4.0
      %v552 = vmul.f32 %v488, 4.0
      %v553 = vmul.f32 %v489, 4.0
      %v554 = vmul.f32 %v490, 4.0
      %v555 = vmul.f32 %v491, 4.0
      %v556 = vmul.f32 %v492, 4.0
      %v557 = vmul.f32 %v493, 4.0
      %v558 = vmul.f32 %v494, 4.0
      %v559 = vmul.f32 %v495, 4.0
      %v560 = vmul.f32 %v496, 4.0
      %v561 = vmul.f32 %v497, 4.0
      %v562 = vmul.f32 %v498, 4.0
      %v563 = vmul.f32 %v499, 4.0
      %v564 = vmul.f32 %v500, 4.0
      %v565 = vmul.f32 %v501, 4.0
      %v566 = vmul.f32 %v502, 4.0
      %v567 = vmul.f32 %v503, 4.0
      %v568 = vmul.f32 %v504, 4.0
      %v569 = vmul.f32 %v505, 4.0
      %v570 = vmul.f32 %v506, 4.0
      %v571 = vmul.f32 %v507, 4.0
      %v572 = vmul.f32 %v508, 4.0
      %v573 = vmul.f32 %v509, 4.0
      %v574 = vmul.f32 %v510, 4.0
      %v575 = vmul.f32 %v511, 4.0
      %v576 = vmul.f32 %v512, 4.0
      %v577 = vmul.f32 %v513, 4.0
      %v578 = vmul.f32 %v514, 4.0
      %v579 = vmul.f32 %v515, 4.0
      %v580 = vmul.f32 %v516, 4.0
      %v581 = vmul.f32 %v517, 4.0
      %v582 = vmul.f32 %v518, 4.0
      %v583 = vmul.f32 %v519, 4.0
      %v584 = vmul.f32 %v520, 4.0
      %v585 = vmul.f32 %v521, 4.0
      %v586 = vmul.f32 %v522, 4.0
      %v587 = vmul.f32 %v523, 4.0
      %v588 = vmul.f32 %v524, 4.0
      %v589 = vmul.f32 %v525, 4.0
      %v590 = vmul.f32 %v526, 4.0
      %v591 = vmul.f32 %v527, 4.0
      %v592 = vmul.f32 %v528, 4.0
      %v593 = vmul.f32 %v529, 4.0
      %v594 = vmul.f32 %v530, 4.0
      %v595 = vmul.f32 %v531, 4.0
      %v596 = vmul.f32 %v532, 4.0
      %v597 = vmul.f32 %v533, 4.0
      %v598 = vmul.f32 %v534, 4.0
      %v599 = vmul.f32 %v535, 4.0
      %v600 = vmul.f32 %v536, 4.0
      %v601 = vmul.f32 %v537, 4.0
      %v602 = vmul.f32 %v538, 4.0
      %v603 = vmul.f32 %v539, %v539
      %v604 = vmul.f32 %v540, %v540
      %v605 = vmul.f32 %v541, %v541
      %v606 = vmul.f32 %v542, %v542
      %v607 = vmul.f32 %v543, %v543
      %v608 = vmul.f32 %v544, %v544
      %v609 = vmul.f32 %v545, %v545
      %v610 = vmul.f32 %v546, %v546
      %v611 = vmul.f32 %v547, %v547
      %v612 = vmul.f32 %v548, %v548
      %v613 = vmul.f32 %v549, %v549
      %v614 = vmul.f32 %v550, %v550
      %v615 = vmul.f32 %v551, %v551
      %v616 = vmul.f32 %v552, %v552
      %v617 = vmul.f32 %v553, %v553
      %v618 = vmul.f32 %v554, %v554
      %v619 = vmul.f32 %v555, %v555
      %v620 = vmul.f32 %v556, %v556
      %v621 = vmul.f32 %v557, %v557
      %v622 = vmul.f32 %v558, %v558
      %v623 = vmul.f32 %v559, %v559
      %v624 = vmul.f32 %v560, %v560
      %v625 = vmul.f32 %v561, %v561
      %v626 = vmul.f32 %v562, %v562
      %v627 = vmul.f32 %v563, %v563
      %v628 = vmul.f32 %v564, %v564
      %v629 = vmul.f32 %v565, %v565
      %v630 = vmul.f32 %v566, %v566
      %v631 = vmul.f32 %v567, %v567
      %v632 = vmul.f32 %v568, %v568
      %v633 = vmul.f32 %v569, %v569
      %v634 = vmul.f32 %v570, %v570
      %v635 = vmul.f32 %v571, %v571
      %v636 = vmul.f32 %v572, %v572
      %v637 = vmul.f32 %v573, %v573
      %v638 = vmul.f32 %v574, %v574
      %v639 = vmul.f32 %v575, %v575
      %v640 = vmul.f32 %v576, %v576
      %v641 = vmul.f32 %v577, %v577
      %v642 = vmul.f32 %v578, %v578
      %v643 = vmul.f32 %v579, %v579
      %v644 = vmul.f32 %v580, %v580
      %v645 = vmul.f32 %v581, %v581
      %v646 = vmul.f32 %v582, %v582
      %v647 = vmul.f32 %v583, %v583
      %v648 = vmul.f32 %v584, %v584
      %v649 = vmul.f32 %v585, %v585
      %v650 = vmul.f32 %v586, %v586
      %v651 = vmul.f32 %v587, %v587
      %v652 = vmul.f32 %v588, %v588
      %v653 = vmul.f32 %v589, %v589
      %v654 = vmul.f32 %v590, %v590
      %v655 = vmul.f32 %v591, %v591
      %v656 = vmul.f32 %v592, %v592
      %v657 = vmul.f32 %v593, %v593
      %v658 = vmul.f32 %v594, %v594
      %v659 = vmul.f32 %v595, %v595
      %v660 = vmul.f32 %v596, %v596
      %v661 = vmul.f32 %v597, %v597
      %v662 = vmul.f32 %v598, %v598
      %v663 = vmul.f32 %v599, %v599
      %v664 = vmul.f32 %v600, %v600
      %v665 = vmul.f32 %v601, %v601
      %v666 = vmul.f32 %v602, %v602
      %vm667 = vcmask 15360
      %v668 = vsel %vm667, %v603, 0.0
      %669 = vadd.xlane.f32.xlu0 %v668
      %v670 = vpop.xlane.xlu0 %669
      %v671 = vsel %vm667, %v604, 0.0
      %672 = vadd.xlane.f32.xlu0 %v671
      %v673 = vpop.xlane.xlu0 %672
      %v674 = vsel %vm667, %v605, 0.0
      %675 = vadd.xlane.f32.xlu0 %v674
      %v676 = vpop.xlane.xlu0 %675
      %v677 = vsel %vm667, %v606, 0.0
      %678 = vadd.xlane.f32.xlu0 %v677
      %v679 = vpop.xlane.xlu0 %678
      %v680 = vsel %vm667, %v607, 0.0
      %681 = vadd.xlane.f32.xlu0 %v680
      %v682 = vpop.xlane.xlu0 %681
      %v683 = vsel %vm667, %v608, 0.0
      %684 = vadd.xlane.f32.xlu0 %v683
      %v685 = vpop.xlane.xlu0 %684
      %v686 = vsel %vm667, %v609, 0.0
      %687 = vadd.xlane.f32.xlu0 %v686
      %v688 = vpop.xlane.xlu0 %687
      %v689 = vsel %vm667, %v610, 0.0
      %690 = vadd.xlane.f32.xlu0 %v689
      %v691 = vpop.xlane.xlu0 %690
      %v692 = vsel %vm667, %v611, 0.0
      %693 = vadd.xlane.f32.xlu0 %v692
      %v694 = vpop.xlane.xlu0 %693
      %v695 = vsel %vm667, %v612, 0.0
      %696 = vadd.xlane.f32.xlu0 %v695
      %v697 = vpop.xlane.xlu0 %696
      %v698 = vsel %vm667, %v613, 0.0
      %699 = vadd.xlane.f32.xlu0 %v698
      %v700 = vpop.xlane.xlu0 %699
      %v701 = vsel %vm667, %v614, 0.0
      %702 = vadd.xlane.f32.xlu0 %v701
      %v703 = vpop.xlane.xlu0 %702
      %v704 = vsel %vm667, %v615, 0.0
      %705 = vadd.xlane.f32.xlu0 %v704
      %v706 = vpop.xlane.xlu0 %705
      %v707 = vsel %vm667, %v616, 0.0
      %708 = vadd.xlane.f32.xlu0 %v707
      %v709 = vpop.xlane.xlu0 %708
      %v710 = vsel %vm667, %v617, 0.0
      %711 = vadd.xlane.f32.xlu0 %v710
      %v712 = vpop.xlane.xlu0 %711
      %v713 = vsel %vm667, %v618, 0.0
      %714 = vadd.xlane.f32.xlu0 %v713
      %v715 = vpop.xlane.xlu0 %714
      %v716 = vsel %vm667, %v619, 0.0
      %717 = vadd.xlane.f32.xlu0 %v716
      %v718 = vpop.xlane.xlu0 %717
      %v719 = vsel %vm667, %v620, 0.0
      %720 = vadd.xlane.f32.xlu0 %v719
      %v721 = vpop.xlane.xlu0 %720
      %v722 = vsel %vm667, %v621, 0.0
      %723 = vadd.xlane.f32.xlu0 %v722
      %v724 = vpop.xlane.xlu0 %723
      %v725 = vsel %vm667, %v622, 0.0
      %726 = vadd.xlane.f32.xlu0 %v725
      %v727 = vpop.xlane.xlu0 %726
      %v728 = vsel %vm667, %v623, 0.0
      %729 = vadd.xlane.f32.xlu0 %v728
      %v730 = vpop.xlane.xlu0 %729
      %v731 = vsel %vm667, %v624, 0.0
      %732 = vadd.xlane.f32.xlu0 %v731
      %v733 = vpop.xlane.xlu0 %732
      %v734 = vsel %vm667, %v625, 0.0
      %735 = vadd.xlane.f32.xlu0 %v734
      %v736 = vpop.xlane.xlu0 %735
      %v737 = vsel %vm667, %v626, 0.0
      %738 = vadd.xlane.f32.xlu0 %v737
      %v739 = vpop.xlane.xlu0 %738
      %v740 = vsel %vm667, %v627, 0.0
      %741 = vadd.xlane.f32.xlu0 %v740
      %v742 = vpop.xlane.xlu0 %741
      %v743 = vsel %vm667, %v628, 0.0
      %744 = vadd.xlane.f32.xlu0 %v743
      %v745 = vpop.xlane.xlu0 %744
      %v746 = vsel %vm667, %v629, 0.0
      %747 = vadd.xlane.f32.xlu0 %v746
      %v748 = vpop.xlane.xlu0 %747
      %v749 = vsel %vm667, %v630, 0.0
      %750 = vadd.xlane.f32.xlu0 %v749
      %v751 = vpop.xlane.xlu0 %750
      %v752 = vsel %vm667, %v631, 0.0
      %753 = vadd.xlane.f32.xlu0 %v752
      %v754 = vpop.xlane.xlu0 %753
      %v755 = vsel %vm667, %v632, 0.0
      %756 = vadd.xlane.f32.xlu0 %v755
      %v757 = vpop.xlane.xlu0 %756
      %v758 = vsel %vm667, %v633, 0.0
      %759 = vadd.xlane.f32.xlu0 %v758
      %v760 = vpop.xlane.xlu0 %759
      %v761 = vsel %vm667, %v634, 0.0
      %762 = vadd.xlane.f32.xlu0 %v761
      %v763 = vpop.xlane.xlu0 %762
      %v764 = vsel %vm667, %v635, 0.0
      %765 = vadd.xlane.f32.xlu0 %v764
      %v766 = vpop.xlane.xlu0 %765
      %v767 = vsel %vm667, %v636, 0.0
      %768 = vadd.xlane.f32.xlu0 %v767
      %v769 = vpop.xlane.xlu0 %768
      %v770 = vsel %vm667, %v637, 0.0
      %771 = vadd.xlane.f32.xlu0 %v770
      %v772 = vpop.xlane.xlu0 %771
      %v773 = vsel %vm667, %v638, 0.0
      %774 = vadd.xlane.f32.xlu0 %v773
      %v775 = vpop.xlane.xlu0 %774
      %v776 = vsel %vm667, %v639, 0.0
      %777 = vadd.xlane.f32.xlu0 %v776
      %v778 = vpop.xlane.xlu0 %777
      %v779 = vsel %vm667, %v640, 0.0
      %780 = vadd.xlane.f32.xlu0 %v779
      %v781 = vpop.xlane.xlu0 %780
      %v782 = vsel %vm667, %v641, 0.0
      %783 = vadd.xlane.f32.xlu0 %v782
      %v784 = vpop.xlane.xlu0 %783
      %v785 = vsel %vm667, %v642, 0.0
      %786 = vadd.xlane.f32.xlu0 %v785
      %v787 = vpop.xlane.xlu0 %786
      %v788 = vsel %vm667, %v643, 0.0
      %789 = vadd.xlane.f32.xlu0 %v788
      %v790 = vpop.xlane.xlu0 %789
      %v791 = vsel %vm667, %v644, 0.0
      %792 = vadd.xlane.f32.xlu0 %v791
      %v793 = vpop.xlane.xlu0 %792
      %v794 = vsel %vm667, %v645, 0.0
      %795 = vadd.xlane.f32.xlu0 %v794
      %v796 = vpop.xlane.xlu0 %795
      %v797 = vsel %vm667, %v646, 0.0
      %798 = vadd.xlane.f32.xlu0 %v797
      %v799 = vpop.xlane.xlu0 %798
      %v800 = vsel %vm667, %v647, 0.0
      %801 = vadd.xlane.f32.xlu0 %v800
      %v802 = vpop.xlane.xlu0 %801
      %v803 = vsel %vm667, %v648, 0.0
      %804 = vadd.xlane.f32.xlu0 %v803
      %v805 = vpop.xlane.xlu0 %804
      %v806 = vsel %vm667, %v649, 0.0
      %807 = vadd.xlane.f32.xlu0 %v806
      %v808 = vpop.xlane.xlu0 %807
      %v809 = vsel %vm667, %v650, 0.0
      %810 = vadd.xlane.f32.xlu0 %v809
      %v811 = vpop.xlane.xlu0 %810
      %v812 = vsel %vm667, %v651, 0.0
      %813 = vadd.xlane.f32.xlu0 %v812
      %v814 = vpop.xlane.xlu0 %813
      %v815 = vsel %vm667, %v652, 0.0
      %816 = vadd.xlane.f32.xlu0 %v815
      %v817 = vpop.xlane.xlu0 %816
      %v818 = vsel %vm667, %v653, 0.0
      %819 = vadd.xlane.f32.xlu0 %v818
      %v820 = vpop.xlane.xlu0 %819
      %v821 = vsel %vm667, %v654, 0.0
      %822 = vadd.xlane.f32.xlu0 %v821
      %v823 = vpop.xlane.xlu0 %822
      %v824 = vsel %vm667, %v655, 0.0
      %825 = vadd.xlane.f32.xlu0 %v824
      %v826 = vpop.xlane.xlu0 %825
      %v827 = vsel %vm667, %v656, 0.0
      %828 = vadd.xlane.f32.xlu0 %v827
      %v829 = vpop.xlane.xlu0 %828
      %v830 = vsel %vm667, %v657, 0.0
      %831 = vadd.xlane.f32.xlu0 %v830
      %v832 = vpop.xlane.xlu0 %831
      %v833 = vsel %vm667, %v658, 0.0
      %834 = vadd.xlane.f32.xlu0 %v833
      %v835 = vpop.xlane.xlu0 %834
      %v836 = vsel %vm667, %v659, 0.0
      %837 = vadd.xlane.f32.xlu0 %v836
      %v838 = vpop.xlane.xlu0 %837
      %v839 = vsel %vm667, %v660, 0.0
      %840 = vadd.xlane.f32.xlu0 %v839
      %v841 = vpop.xlane.xlu0 %840
      %v842 = vsel %vm667, %v661, 0.0
      %843 = vadd.xlane.f32.xlu0 %v842
      %v844 = vpop.xlane.xlu0 %843
      %v845 = vsel %vm667, %v662, 0.0
      %846 = vadd.xlane.f32.xlu0 %v845
      %v847 = vpop.xlane.xlu0 %846
      %v848 = vsel %vm667, %v663, 0.0
      %849 = vadd.xlane.f32.xlu0 %v848
      %v850 = vpop.xlane.xlu0 %849
      %v851 = vsel %vm667, %v664, 0.0
      %852 = vadd.xlane.f32.xlu0 %v851
      %v853 = vpop.xlane.xlu0 %852
      %v854 = vsel %vm667, %v665, 0.0
      %855 = vadd.xlane.f32.xlu0 %v854
      %v856 = vpop.xlane.xlu0 %855
      %v857 = vsel %vm667, %v666, 0.0
      %858 = vadd.xlane.f32.xlu0 %v857
      %v859 = vpop.xlane.xlu0 %858
      %v860 = vrsqrt.pop %v670
      %v861 = vmul.f32 %v860, %v670
      %v862 = vmul.f32 %v861, %v860
      %v863 = vmul.f32 0.5, %v862
      %v864 = vsub.f32 1.5, %v863
      %v865 = vmul.f32 %v860, %v864
      %v866 = vmul.f32 %v670, %v865
      %vm867 = vcmp.eq.f32.partialorder %v670, inf
      %v868 = vsel %vm867, %v670, %v866
      %vm869 = vcmp.eq.f32.partialorder %v670, 0.0
      %v870 = vand.u32 %v670, 2147483648
      %v871 = vsel %vm869, %v870, %v868
      %v872 = vrsqrt.pop %v673
      %v873 = vmul.f32 %v872, %v673
      %v874 = vmul.f32 %v873, %v872
      %v875 = vmul.f32 0.5, %v874
      %v876 = vsub.f32 1.5, %v875
      %v877 = vmul.f32 %v872, %v876
      %v878 = vmul.f32 %v673, %v877
      %vm879 = vcmp.eq.f32.partialorder %v673, inf
      %v880 = vsel %vm879, %v673, %v878
      %vm881 = vcmp.eq.f32.partialorder %v673, 0.0
      %v882 = vand.u32 %v673, 2147483648
      %v883 = vsel %vm881, %v882, %v880
      %v884 = vrsqrt.pop %v676
      %v885 = vmul.f32 %v884, %v676
      %v886 = vmul.f32 %v885, %v884
      %v887 = vmul.f32 0.5, %v886
      %v888 = vsub.f32 1.5, %v887
      %v889 = vmul.f32 %v884, %v888
      %v890 = vmul.f32 %v676, %v889
      %vm891 = vcmp.eq.f32.partialorder %v676, inf
      %v892 = vsel %vm891, %v676, %v890
      %vm893 = vcmp.eq.f32.partialorder %v676, 0.0
      %v894 = vand.u32 %v676, 2147483648
      %v895 = vsel %vm893, %v894, %v892
      %v896 = vrsqrt.pop %v679
      %v897 = vmul.f32 %v896, %v679
      %v898 = vmul.f32 %v897, %v896
      %v899 = vmul.f32 0.5, %v898
      %v900 = vsub.f32 1.5, %v899
      %v901 = vmul.f32 %v896, %v900
      %v902 = vmul.f32 %v679, %v901
      %vm903 = vcmp.eq.f32.partialorder %v679, inf
      %v904 = vsel %vm903, %v679, %v902
      %vm905 = vcmp.eq.f32.partialorder %v679, 0.0
      %v906 = vand.u32 %v679, 2147483648
      %v907 = vsel %vm905, %v906, %v904
      %v908 = vrsqrt.pop %v682
      %v909 = vmul.f32 %v908, %v682
      %v910 = vmul.f32 %v909, %v908
      %v911 = vmul.f32 0.5, %v910
      %v912 = vsub.f32 1.5, %v911
      %v913 = vmul.f32 %v908, %v912
      %v914 = vmul.f32 %v682, %v913
      %vm915 = vcmp.eq.f32.partialorder %v682, inf
      %v916 = vsel %vm915, %v682, %v914
      %vm917 = vcmp.eq.f32.partialorder %v682, 0.0
      %v918 = vand.u32 %v682, 2147483648
      %v919 = vsel %vm917, %v918, %v916
      %v920 = vrsqrt.pop %v685
      %v921 = vmul.f32 %v920, %v685
      %v922 = vmul.f32 %v921, %v920
      %v923 = vmul.f32 0.5, %v922
      %v924 = vsub.f32 1.5, %v923
      %v925 = vmul.f32 %v920, %v924
      %v926 = vmul.f32 %v685, %v925
      %vm927 = vcmp.eq.f32.partialorder %v685, inf
      %v928 = vsel %vm927, %v685, %v926
      %vm929 = vcmp.eq.f32.partialorder %v685, 0.0
      %v930 = vand.u32 %v685, 2147483648
      %v931 = vsel %vm929, %v930, %v928
      %v932 = vrsqrt.pop %v688
      %v933 = vmul.f32 %v932, %v688
      %v934 = vmul.f32 %v933, %v932
      %v935 = vmul.f32 0.5, %v934
      %v936 = vsub.f32 1.5, %v935
      %v937 = vmul.f32 %v932, %v936
      %v938 = vmul.f32 %v688, %v937
      %vm939 = vcmp.eq.f32.partialorder %v688, inf
      %v940 = vsel %vm939, %v688, %v938
      %vm941 = vcmp.eq.f32.partialorder %v688, 0.0
      %v942 = vand.u32 %v688, 2147483648
      %v943 = vsel %vm941, %v942, %v940
      %v944 = vrsqrt.pop %v691
      %v945 = vmul.f32 %v944, %v691
      %v946 = vmul.f32 %v945, %v944
      %v947 = vmul.f32 0.5, %v946
      %v948 = vsub.f32 1.5, %v947
      %v949 = vmul.f32 %v944, %v948
      %v950 = vmul.f32 %v691, %v949
      %vm951 = vcmp.eq.f32.partialorder %v691, inf
      %v952 = vsel %vm951, %v691, %v950
      %vm953 = vcmp.eq.f32.partialorder %v691, 0.0
      %v954 = vand.u32 %v691, 2147483648
      %v955 = vsel %vm953, %v954, %v952
      %v956 = vrsqrt.pop %v694
      %v957 = vmul.f32 %v956, %v694
      %v958 = vmul.f32 %v957, %v956
      %v959 = vmul.f32 0.5, %v958
      %v960 = vsub.f32 1.5, %v959
      %v961 = vmul.f32 %v956, %v960
      %v962 = vmul.f32 %v694, %v961
      %vm963 = vcmp.eq.f32.partialorder %v694, inf
      %v964 = vsel %vm963, %v694, %v962
      %vm965 = vcmp.eq.f32.partialorder %v694, 0.0
      %v966 = vand.u32 %v694, 2147483648
      %v967 = vsel %vm965, %v966, %v964
      %v968 = vrsqrt.pop %v697
      %v969 = vmul.f32 %v968, %v697
      %v970 = vmul.f32 %v969, %v968
      %v971 = vmul.f32 0.5, %v970
      %v972 = vsub.f32 1.5, %v971
      %v973 = vmul.f32 %v968, %v972
      %v974 = vmul.f32 %v697, %v973
      %vm975 = vcmp.eq.f32.partialorder %v697, inf
      %v976 = vsel %vm975, %v697, %v974
      %vm977 = vcmp.eq.f32.partialorder %v697, 0.0
      %v978 = vand.u32 %v697, 2147483648
      %v979 = vsel %vm977, %v978, %v976
      %v980 = vrsqrt.pop %v700
      %v981 = vmul.f32 %v980, %v700
      %v982 = vmul.f32 %v981, %v980
      %v983 = vmul.f32 0.5, %v982
      %v984 = vsub.f32 1.5, %v983
      %v985 = vmul.f32 %v980, %v984
      %v986 = vmul.f32 %v700, %v985
      %vm987 = vcmp.eq.f32.partialorder %v700, inf
      %v988 = vsel %vm987, %v700, %v986
      %vm989 = vcmp.eq.f32.partialorder %v700, 0.0
      %v990 = vand.u32 %v700, 2147483648
      %v991 = vsel %vm989, %v990, %v988
      %v992 = vrsqrt.pop %v703
      %v993 = vmul.f32 %v992, %v703
      %v994 = vmul.f32 %v993, %v992
      %v995 = vmul.f32 0.5, %v994
      %v996 = vsub.f32 1.5, %v995
      %v997 = vmul.f32 %v992, %v996
      %v998 = vmul.f32 %v703, %v997
      %vm999 = vcmp.eq.f32.partialorder %v703, inf
      %v1000 = vsel %vm999, %v703, %v998
      %vm1001 = vcmp.eq.f32.partialorder %v703, 0.0
      %v1002 = vand.u32 %v703, 2147483648
      %v1003 = vsel %vm1001, %v1002, %v1000
      %v1004 = vrsqrt.pop %v706
      %v1005 = vmul.f32 %v1004, %v706
      %v1006 = vmul.f32 %v1005, %v1004
      %v1007 = vmul.f32 0.5, %v1006
      %v1008 = vsub.f32 1.5, %v1007
      %v1009 = vmul.f32 %v1004, %v1008
      %v1010 = vmul.f32 %v706, %v1009
      %vm1011 = vcmp.eq.f32.partialorder %v706, inf
      %v1012 = vsel %vm1011, %v706, %v1010
      %vm1013 = vcmp.eq.f32.partialorder %v706, 0.0
      %v1014 = vand.u32 %v706, 2147483648
      %v1015 = vsel %vm1013, %v1014, %v1012
      %v1016 = vrsqrt.pop %v709
      %v1017 = vmul.f32 %v1016, %v709
      %v1018 = vmul.f32 %v1017, %v1016
      %v1019 = vmul.f32 0.5, %v1018
      %v1020 = vsub.f32 1.5, %v1019
      %v1021 = vmul.f32 %v1016, %v1020
      %v1022 = vmul.f32 %v709, %v1021
      %vm1023 = vcmp.eq.f32.partialorder %v709, inf
      %v1024 = vsel %vm1023, %v709, %v1022
      %vm1025 = vcmp.eq.f32.partialorder %v709, 0.0
      %v1026 = vand.u32 %v709, 2147483648
      %v1027 = vsel %vm1025, %v1026, %v1024
      %v1028 = vrsqrt.pop %v712
      %v1029 = vmul.f32 %v1028, %v712
      %v1030 = vmul.f32 %v1029, %v1028
      %v1031 = vmul.f32 0.5, %v1030
      %v1032 = vsub.f32 1.5, %v1031
      %v1033 = vmul.f32 %v1028, %v1032
      %v1034 = vmul.f32 %v712, %v1033
      %vm1035 = vcmp.eq.f32.partialorder %v712, inf
      %v1036 = vsel %vm1035, %v712, %v1034
      %vm1037 = vcmp.eq.f32.partialorder %v712, 0.0
      %v1038 = vand.u32 %v712, 2147483648
      %v1039 = vsel %vm1037, %v1038, %v1036
      %v1040 = vrsqrt.pop %v715
      %v1041 = vmul.f32 %v1040, %v715
      %v1042 = vmul.f32 %v1041, %v1040
      %v1043 = vmul.f32 0.5, %v1042
      %v1044 = vsub.f32 1.5, %v1043
      %v1045 = vmul.f32 %v1040, %v1044
      %v1046 = vmul.f32 %v715, %v1045
      %vm1047 = vcmp.eq.f32.partialorder %v715, inf
      %v1048 = vsel %vm1047, %v715, %v1046
      %vm1049 = vcmp.eq.f32.partialorder %v715, 0.0
      %v1050 = vand.u32 %v715, 2147483648
      %v1051 = vsel %vm1049, %v1050, %v1048
      %v1052 = vrsqrt.pop %v718
      %v1053 = vmul.f32 %v1052, %v718
      %v1054 = vmul.f32 %v1053, %v1052
      %v1055 = vmul.f32 0.5, %v1054
      %v1056 = vsub.f32 1.5, %v1055
      %v1057 = vmul.f32 %v1052, %v1056
      %v1058 = vmul.f32 %v718, %v1057
      %vm1059 = vcmp.eq.f32.partialorder %v718, inf
      %v1060 = vsel %vm1059, %v718, %v1058
      %vm1061 = vcmp.eq.f32.partialorder %v718, 0.0
      %v1062 = vand.u32 %v718, 2147483648
      %v1063 = vsel %vm1061, %v1062, %v1060
      %v1064 = vrsqrt.pop %v721
      %v1065 = vmul.f32 %v1064, %v721
      %v1066 = vmul.f32 %v1065, %v1064
      %v1067 = vmul.f32 0.5, %v1066
      %v1068 = vsub.f32 1.5, %v1067
      %v1069 = vmul.f32 %v1064, %v1068
      %v1070 = vmul.f32 %v721, %v1069
      %vm1071 = vcmp.eq.f32.partialorder %v721, inf
      %v1072 = vsel %vm1071, %v721, %v1070
      %vm1073 = vcmp.eq.f32.partialorder %v721, 0.0
      %v1074 = vand.u32 %v721, 2147483648
      %v1075 = vsel %vm1073, %v1074, %v1072
      %v1076 = vrsqrt.pop %v724
      %v1077 = vmul.f32 %v1076, %v724
      %v1078 = vmul.f32 %v1077, %v1076
      %v1079 = vmul.f32 0.5, %v1078
      %v1080 = vsub.f32 1.5, %v1079
      %v1081 = vmul.f32 %v1076, %v1080
      %v1082 = vmul.f32 %v724, %v1081
      %vm1083 = vcmp.eq.f32.partialorder %v724, inf
      %v1084 = vsel %vm1083, %v724, %v1082
      %vm1085 = vcmp.eq.f32.partialorder %v724, 0.0
      %v1086 = vand.u32 %v724, 2147483648
      %v1087 = vsel %vm1085, %v1086, %v1084
      %v1088 = vrsqrt.pop %v727
      %v1089 = vmul.f32 %v1088, %v727
      %v1090 = vmul.f32 %v1089, %v1088
      %v1091 = vmul.f32 0.5, %v1090
      %v1092 = vsub.f32 1.5, %v1091
      %v1093 = vmul.f32 %v1088, %v1092
      %v1094 = vmul.f32 %v727, %v1093
      %vm1095 = vcmp.eq.f32.partialorder %v727, inf
      %v1096 = vsel %vm1095, %v727, %v1094
      %vm1097 = vcmp.eq.f32.partialorder %v727, 0.0
      %v1098 = vand.u32 %v727, 2147483648
      %v1099 = vsel %vm1097, %v1098, %v1096
      %v1100 = vrsqrt.pop %v730
      %v1101 = vmul.f32 %v1100, %v730
      %v1102 = vmul.f32 %v1101, %v1100
      %v1103 = vmul.f32 0.5, %v1102
      %v1104 = vsub.f32 1.5, %v1103
      %v1105 = vmul.f32 %v1100, %v1104
      %v1106 = vmul.f32 %v730, %v1105
      %vm1107 = vcmp.eq.f32.partialorder %v730, inf
      %v1108 = vsel %vm1107, %v730, %v1106
      %vm1109 = vcmp.eq.f32.partialorder %v730, 0.0
      %v1110 = vand.u32 %v730, 2147483648
      %v1111 = vsel %vm1109, %v1110, %v1108
      %v1112 = vrsqrt.pop %v733
      %v1113 = vmul.f32 %v1112, %v733
      %v1114 = vmul.f32 %v1113, %v1112
      %v1115 = vmul.f32 0.5, %v1114
      %v1116 = vsub.f32 1.5, %v1115
      %v1117 = vmul.f32 %v1112, %v1116
      %v1118 = vmul.f32 %v733, %v1117
      %vm1119 = vcmp.eq.f32.partialorder %v733, inf
      %v1120 = vsel %vm1119, %v733, %v1118
      %vm1121 = vcmp.eq.f32.partialorder %v733, 0.0
      %v1122 = vand.u32 %v733, 2147483648
      %v1123 = vsel %vm1121, %v1122, %v1120
      %v1124 = vrsqrt.pop %v736
      %v1125 = vmul.f32 %v1124, %v736
      %v1126 = vmul.f32 %v1125, %v1124
      %v1127 = vmul.f32 0.5, %v1126
      %v1128 = vsub.f32 1.5, %v1127
      %v1129 = vmul.f32 %v1124, %v1128
      %v1130 = vmul.f32 %v736, %v1129
      %vm1131 = vcmp.eq.f32.partialorder %v736, inf
      %v1132 = vsel %vm1131, %v736, %v1130
      %vm1133 = vcmp.eq.f32.partialorder %v736, 0.0
      %v1134 = vand.u32 %v736, 2147483648
      %v1135 = vsel %vm1133, %v1134, %v1132
      %v1136 = vrsqrt.pop %v739
      %v1137 = vmul.f32 %v1136, %v739
      %v1138 = vmul.f32 %v1137, %v1136
      %v1139 = vmul.f32 0.5, %v1138
      %v1140 = vsub.f32 1.5, %v1139
      %v1141 = vmul.f32 %v1136, %v1140
      %v1142 = vmul.f32 %v739, %v1141
      %vm1143 = vcmp.eq.f32.partialorder %v739, inf
      %v1144 = vsel %vm1143, %v739, %v1142
      %vm1145 = vcmp.eq.f32.partialorder %v739, 0.0
      %v1146 = vand.u32 %v739, 2147483648
      %v1147 = vsel %vm1145, %v1146, %v1144
      %v1148 = vrsqrt.pop %v742
      %v1149 = vmul.f32 %v1148, %v742
      %v1150 = vmul.f32 %v1149, %v1148
      %v1151 = vmul.f32 0.5, %v1150
      %v1152 = vsub.f32 1.5, %v1151
      %v1153 = vmul.f32 %v1148, %v1152
      %v1154 = vmul.f32 %v742, %v1153
      %vm1155 = vcmp.eq.f32.partialorder %v742, inf
      %v1156 = vsel %vm1155, %v742, %v1154
      %vm1157 = vcmp.eq.f32.partialorder %v742, 0.0
      %v1158 = vand.u32 %v742, 2147483648
      %v1159 = vsel %vm1157, %v1158, %v1156
      %v1160 = vrsqrt.pop %v745
      %v1161 = vmul.f32 %v1160, %v745
      %v1162 = vmul.f32 %v1161, %v1160
      %v1163 = vmul.f32 0.5, %v1162
      %v1164 = vsub.f32 1.5, %v1163
      %v1165 = vmul.f32 %v1160, %v1164
      %v1166 = vmul.f32 %v745, %v1165
      %vm1167 = vcmp.eq.f32.partialorder %v745, inf
      %v1168 = vsel %vm1167, %v745, %v1166
      %vm1169 = vcmp.eq.f32.partialorder %v745, 0.0
      %v1170 = vand.u32 %v745, 2147483648
      %v1171 = vsel %vm1169, %v1170, %v1168
      %v1172 = vrsqrt.pop %v748
      %v1173 = vmul.f32 %v1172, %v748
      %v1174 = vmul.f32 %v1173, %v1172
      %v1175 = vmul.f32 0.5, %v1174
      %v1176 = vsub.f32 1.5, %v1175
      %v1177 = vmul.f32 %v1172, %v1176
      %v1178 = vmul.f32 %v748, %v1177
      %vm1179 = vcmp.eq.f32.partialorder %v748, inf
      %v1180 = vsel %vm1179, %v748, %v1178
      %vm1181 = vcmp.eq.f32.partialorder %v748, 0.0
      %v1182 = vand.u32 %v748, 2147483648
      %v1183 = vsel %vm1181, %v1182, %v1180
      %v1184 = vrsqrt.pop %v751
      %v1185 = vmul.f32 %v1184, %v751
      %v1186 = vmul.f32 %v1185, %v1184
      %v1187 = vmul.f32 0.5, %v1186
      %v1188 = vsub.f32 1.5, %v1187
      %v1189 = vmul.f32 %v1184, %v1188
      %v1190 = vmul.f32 %v751, %v1189
      %vm1191 = vcmp.eq.f32.partialorder %v751, inf
      %v1192 = vsel %vm1191, %v751, %v1190
      %vm1193 = vcmp.eq.f32.partialorder %v751, 0.0
      %v1194 = vand.u32 %v751, 2147483648
      %v1195 = vsel %vm1193, %v1194, %v1192
      %v1196 = vrsqrt.pop %v754
      %v1197 = vmul.f32 %v1196, %v754
      %v1198 = vmul.f32 %v1197, %v1196
      %v1199 = vmul.f32 0.5, %v1198
      %v1200 = vsub.f32 1.5, %v1199
      %v1201 = vmul.f32 %v1196, %v1200
      %v1202 = vmul.f32 %v754, %v1201
      %vm1203 = vcmp.eq.f32.partialorder %v754, inf
      %v1204 = vsel %vm1203, %v754, %v1202
      %vm1205 = vcmp.eq.f32.partialorder %v754, 0.0
      %v1206 = vand.u32 %v754, 2147483648
      %v1207 = vsel %vm1205, %v1206, %v1204
      %v1208 = vrsqrt.pop %v757
      %v1209 = vmul.f32 %v1208, %v757
      %v1210 = vmul.f32 %v1209, %v1208
      %v1211 = vmul.f32 0.5, %v1210
      %v1212 = vsub.f32 1.5, %v1211
      %v1213 = vmul.f32 %v1208, %v1212
      %v1214 = vmul.f32 %v757, %v1213
      %vm1215 = vcmp.eq.f32.partialorder %v757, inf
      %v1216 = vsel %vm1215, %v757, %v1214
      %vm1217 = vcmp.eq.f32.partialorder %v757, 0.0
      %v1218 = vand.u32 %v757, 2147483648
      %v1219 = vsel %vm1217, %v1218, %v1216
      %v1220 = vrsqrt.pop %v760
      %v1221 = vmul.f32 %v1220, %v760
      %v1222 = vmul.f32 %v1221, %v1220
      %v1223 = vmul.f32 0.5, %v1222
      %v1224 = vsub.f32 1.5, %v1223
      %v1225 = vmul.f32 %v1220, %v1224
      %v1226 = vmul.f32 %v760, %v1225
      %vm1227 = vcmp.eq.f32.partialorder %v760, inf
      %v1228 = vsel %vm1227, %v760, %v1226
      %vm1229 = vcmp.eq.f32.partialorder %v760, 0.0
      %v1230 = vand.u32 %v760, 2147483648
      %v1231 = vsel %vm1229, %v1230, %v1228
      %v1232 = vrsqrt.pop %v763
      %v1233 = vmul.f32 %v1232, %v763
      %v1234 = vmul.f32 %v1233, %v1232
      %v1235 = vmul.f32 0.5, %v1234
      %v1236 = vsub.f32 1.5, %v1235
      %v1237 = vmul.f32 %v1232, %v1236
      %v1238 = vmul.f32 %v763, %v1237
      %vm1239 = vcmp.eq.f32.partialorder %v763, inf
      %v1240 = vsel %vm1239, %v763, %v1238
      %vm1241 = vcmp.eq.f32.partialorder %v763, 0.0
      %v1242 = vand.u32 %v763, 2147483648
      %v1243 = vsel %vm1241, %v1242, %v1240
      %v1244 = vrsqrt.pop %v766
      %v1245 = vmul.f32 %v1244, %v766
      %v1246 = vmul.f32 %v1245, %v1244
      %v1247 = vmul.f32 0.5, %v1246
      %v1248 = vsub.f32 1.5, %v1247
      %v1249 = vmul.f32 %v1244, %v1248
      %v1250 = vmul.f32 %v766, %v1249
      %vm1251 = vcmp.eq.f32.partialorder %v766, inf
      %v1252 = vsel %vm1251, %v766, %v1250
      %vm1253 = vcmp.eq.f32.partialorder %v766, 0.0
      %v1254 = vand.u32 %v766, 2147483648
      %v1255 = vsel %vm1253, %v1254, %v1252
      %v1256 = vrsqrt.pop %v769
      %v1257 = vmul.f32 %v1256, %v769
      %v1258 = vmul.f32 %v1257, %v1256
      %v1259 = vmul.f32 0.5, %v1258
      %v1260 = vsub.f32 1.5, %v1259
      %v1261 = vmul.f32 %v1256, %v1260
      %v1262 = vmul.f32 %v769, %v1261
      %vm1263 = vcmp.eq.f32.partialorder %v769, inf
      %v1264 = vsel %vm1263, %v769, %v1262
      %vm1265 = vcmp.eq.f32.partialorder %v769, 0.0
      %v1266 = vand.u32 %v769, 2147483648
      %v1267 = vsel %vm1265, %v1266, %v1264
      %v1268 = vrsqrt.pop %v772
      %v1269 = vmul.f32 %v1268, %v772
      %v1270 = vmul.f32 %v1269, %v1268
      %v1271 = vmul.f32 0.5, %v1270
      %v1272 = vsub.f32 1.5, %v1271
      %v1273 = vmul.f32 %v1268, %v1272
      %v1274 = vmul.f32 %v772, %v1273
      %vm1275 = vcmp.eq.f32.partialorder %v772, inf
      %v1276 = vsel %vm1275, %v772, %v1274
      %vm1277 = vcmp.eq.f32.partialorder %v772, 0.0
      %v1278 = vand.u32 %v772, 2147483648
      %v1279 = vsel %vm1277, %v1278, %v1276
      %v1280 = vrsqrt.pop %v775
      %v1281 = vmul.f32 %v1280, %v775
      %v1282 = vmul.f32 %v1281, %v1280
      %v1283 = vmul.f32 0.5, %v1282
      %v1284 = vsub.f32 1.5, %v1283
      %v1285 = vmul.f32 %v1280, %v1284
      %v1286 = vmul.f32 %v775, %v1285
      %vm1287 = vcmp.eq.f32.partialorder %v775, inf
      %v1288 = vsel %vm1287, %v775, %v1286
      %vm1289 = vcmp.eq.f32.partialorder %v775, 0.0
      %v1290 = vand.u32 %v775, 2147483648
      %v1291 = vsel %vm1289, %v1290, %v1288
      %v1292 = vrsqrt.pop %v778
      %v1293 = vmul.f32 %v1292, %v778
      %v1294 = vmul.f32 %v1293, %v1292
      %v1295 = vmul.f32 0.5, %v1294
      %v1296 = vsub.f32 1.5, %v1295
      %v1297 = vmul.f32 %v1292, %v1296
      %v1298 = vmul.f32 %v778, %v1297
      %vm1299 = vcmp.eq.f32.partialorder %v778, inf
      %v1300 = vsel %vm1299, %v778, %v1298
      %vm1301 = vcmp.eq.f32.partialorder %v778, 0.0
      %v1302 = vand.u32 %v778, 2147483648
      %v1303 = vsel %vm1301, %v1302, %v1300
      %v1304 = vrsqrt.pop %v781
      %v1305 = vmul.f32 %v1304, %v781
      %v1306 = vmul.f32 %v1305, %v1304
      %v1307 = vmul.f32 0.5, %v1306
      %v1308 = vsub.f32 1.5, %v1307
      %v1309 = vmul.f32 %v1304, %v1308
      %v1310 = vmul.f32 %v781, %v1309
      %vm1311 = vcmp.eq.f32.partialorder %v781, inf
      %v1312 = vsel %vm1311, %v781, %v1310
      %vm1313 = vcmp.eq.f32.partialorder %v781, 0.0
      %v1314 = vand.u32 %v781, 2147483648
      %v1315 = vsel %vm1313, %v1314, %v1312
      %v1316 = vrsqrt.pop %v784
      %v1317 = vmul.f32 %v1316, %v784
      %v1318 = vmul.f32 %v1317, %v1316
      %v1319 = vmul.f32 0.5, %v1318
      %v1320 = vsub.f32 1.5, %v1319
      %v1321 = vmul.f32 %v1316, %v1320
      %v1322 = vmul.f32 %v784, %v1321
      %vm1323 = vcmp.eq.f32.partialorder %v784, inf
      %v1324 = vsel %vm1323, %v784, %v1322
      %vm1325 = vcmp.eq.f32.partialorder %v784, 0.0
      %v1326 = vand.u32 %v784, 2147483648
      %v1327 = vsel %vm1325, %v1326, %v1324
      %v1328 = vrsqrt.pop %v787
      %v1329 = vmul.f32 %v1328, %v787
      %v1330 = vmul.f32 %v1329, %v1328
      %v1331 = vmul.f32 0.5, %v1330
      %v1332 = vsub.f32 1.5, %v1331
      %v1333 = vmul.f32 %v1328, %v1332
      %v1334 = vmul.f32 %v787, %v1333
      %vm1335 = vcmp.eq.f32.partialorder %v787, inf
      %v1336 = vsel %vm1335, %v787, %v1334
      %vm1337 = vcmp.eq.f32.partialorder %v787, 0.0
      %v1338 = vand.u32 %v787, 2147483648
      %v1339 = vsel %vm1337, %v1338, %v1336
      %v1340 = vrsqrt.pop %v790
      %v1341 = vmul.f32 %v1340, %v790
      %v1342 = vmul.f32 %v1341, %v1340
      %v1343 = vmul.f32 0.5, %v1342
      %v1344 = vsub.f32 1.5, %v1343
      %v1345 = vmul.f32 %v1340, %v1344
      %v1346 = vmul.f32 %v790, %v1345
      %vm1347 = vcmp.eq.f32.partialorder %v790, inf
      %v1348 = vsel %vm1347, %v790, %v1346
      %vm1349 = vcmp.eq.f32.partialorder %v790, 0.0
      %v1350 = vand.u32 %v790, 2147483648
      %v1351 = vsel %vm1349, %v1350, %v1348
      %v1352 = vrsqrt.pop %v793
      %v1353 = vmul.f32 %v1352, %v793
      %v1354 = vmul.f32 %v1353, %v1352
      %v1355 = vmul.f32 0.5, %v1354
      %v1356 = vsub.f32 1.5, %v1355
      %v1357 = vmul.f32 %v1352, %v1356
      %v1358 = vmul.f32 %v793, %v1357
      %vm1359 = vcmp.eq.f32.partialorder %v793, inf
      %v1360 = vsel %vm1359, %v793, %v1358
      %vm1361 = vcmp.eq.f32.partialorder %v793, 0.0
      %v1362 = vand.u32 %v793, 2147483648
      %v1363 = vsel %vm1361, %v1362, %v1360
      %v1364 = vrsqrt.pop %v796
      %v1365 = vmul.f32 %v1364, %v796
      %v1366 = vmul.f32 %v1365, %v1364
      %v1367 = vmul.f32 0.5, %v1366
      %v1368 = vsub.f32 1.5, %v1367
      %v1369 = vmul.f32 %v1364, %v1368
      %v1370 = vmul.f32 %v796, %v1369
      %vm1371 = vcmp.eq.f32.partialorder %v796, inf
      %v1372 = vsel %vm1371, %v796, %v1370
      %vm1373 = vcmp.eq.f32.partialorder %v796, 0.0
      %v1374 = vand.u32 %v796, 2147483648
      %v1375 = vsel %vm1373, %v1374, %v1372
      %v1376 = vrsqrt.pop %v799
      %v1377 = vmul.f32 %v1376, %v799
      %v1378 = vmul.f32 %v1377, %v1376
      %v1379 = vmul.f32 0.5, %v1378
      %v1380 = vsub.f32 1.5, %v1379
      %v1381 = vmul.f32 %v1376, %v1380
      %v1382 = vmul.f32 %v799, %v1381
      %vm1383 = vcmp.eq.f32.partialorder %v799, inf
      %v1384 = vsel %vm1383, %v799, %v1382
      %vm1385 = vcmp.eq.f32.partialorder %v799, 0.0
      %v1386 = vand.u32 %v799, 2147483648
      %v1387 = vsel %vm1385, %v1386, %v1384
      %v1388 = vrsqrt.pop %v802
      %v1389 = vmul.f32 %v1388, %v802
      %v1390 = vmul.f32 %v1389, %v1388
      %v1391 = vmul.f32 0.5, %v1390
      %v1392 = vsub.f32 1.5, %v1391
      %v1393 = vmul.f32 %v1388, %v1392
      %v1394 = vmul.f32 %v802, %v1393
      %vm1395 = vcmp.eq.f32.partialorder %v802, inf
      %v1396 = vsel %vm1395, %v802, %v1394
      %vm1397 = vcmp.eq.f32.partialorder %v802, 0.0
      %v1398 = vand.u32 %v802, 2147483648
      %v1399 = vsel %vm1397, %v1398, %v1396
      %v1400 = vrsqrt.pop %v805
      %v1401 = vmul.f32 %v1400, %v805
      %v1402 = vmul.f32 %v1401, %v1400
      %v1403 = vmul.f32 0.5, %v1402
      %v1404 = vsub.f32 1.5, %v1403
      %v1405 = vmul.f32 %v1400, %v1404
      %v1406 = vmul.f32 %v805, %v1405
      %vm1407 = vcmp.eq.f32.partialorder %v805, inf
      %v1408 = vsel %vm1407, %v805, %v1406
      %vm1409 = vcmp.eq.f32.partialorder %v805, 0.0
      %v1410 = vand.u32 %v805, 2147483648
      %v1411 = vsel %vm1409, %v1410, %v1408
      %v1412 = vrsqrt.pop %v808
      %v1413 = vmul.f32 %v1412, %v808
      %v1414 = vmul.f32 %v1413, %v1412
      %v1415 = vmul.f32 0.5, %v1414
      %v1416 = vsub.f32 1.5, %v1415
      %v1417 = vmul.f32 %v1412, %v1416
      %v1418 = vmul.f32 %v808, %v1417
      %vm1419 = vcmp.eq.f32.partialorder %v808, inf
      %v1420 = vsel %vm1419, %v808, %v1418
      %vm1421 = vcmp.eq.f32.partialorder %v808, 0.0
      %v1422 = vand.u32 %v808, 2147483648
      %v1423 = vsel %vm1421, %v1422, %v1420
      %v1424 = vrsqrt.pop %v811
      %v1425 = vmul.f32 %v1424, %v811
      %v1426 = vmul.f32 %v1425, %v1424
      %v1427 = vmul.f32 0.5, %v1426
      %v1428 = vsub.f32 1.5, %v1427
      %v1429 = vmul.f32 %v1424, %v1428
      %v1430 = vmul.f32 %v811, %v1429
      %vm1431 = vcmp.eq.f32.partialorder %v811, inf
      %v1432 = vsel %vm1431, %v811, %v1430
      %vm1433 = vcmp.eq.f32.partialorder %v811, 0.0
      %v1434 = vand.u32 %v811, 2147483648
      %v1435 = vsel %vm1433, %v1434, %v1432
      %v1436 = vrsqrt.pop %v814
      %v1437 = vmul.f32 %v1436, %v814
      %v1438 = vmul.f32 %v1437, %v1436
      %v1439 = vmul.f32 0.5, %v1438
      %v1440 = vsub.f32 1.5, %v1439
      %v1441 = vmul.f32 %v1436, %v1440
      %v1442 = vmul.f32 %v814, %v1441
      %vm1443 = vcmp.eq.f32.partialorder %v814, inf
      %v1444 = vsel %vm1443, %v814, %v1442
      %vm1445 = vcmp.eq.f32.partialorder %v814, 0.0
      %v1446 = vand.u32 %v814, 2147483648
      %v1447 = vsel %vm1445, %v1446, %v1444
      %v1448 = vrsqrt.pop %v817
      %v1449 = vmul.f32 %v1448, %v817
      %v1450 = vmul.f32 %v1449, %v1448
      %v1451 = vmul.f32 0.5, %v1450
      %v1452 = vsub.f32 1.5, %v1451
      %v1453 = vmul.f32 %v1448, %v1452
      %v1454 = vmul.f32 %v817, %v1453
      %vm1455 = vcmp.eq.f32.partialorder %v817, inf
      %v1456 = vsel %vm1455, %v817, %v1454
      %vm1457 = vcmp.eq.f32.partialorder %v817, 0.0
      %v1458 = vand.u32 %v817, 2147483648
      %v1459 = vsel %vm1457, %v1458, %v1456
      %v1460 = vrsqrt.pop %v820
      %v1461 = vmul.f32 %v1460, %v820
      %v1462 = vmul.f32 %v1461, %v1460
      %v1463 = vmul.f32 0.5, %v1462
      %v1464 = vsub.f32 1.5, %v1463
      %v1465 = vmul.f32 %v1460, %v1464
      %v1466 = vmul.f32 %v820, %v1465
      %vm1467 = vcmp.eq.f32.partialorder %v820, inf
      %v1468 = vsel %vm1467, %v820, %v1466
      %vm1469 = vcmp.eq.f32.partialorder %v820, 0.0
      %v1470 = vand.u32 %v820, 2147483648
      %v1471 = vsel %vm1469, %v1470, %v1468
      %v1472 = vrsqrt.pop %v823
      %v1473 = vmul.f32 %v1472, %v823
      %v1474 = vmul.f32 %v1473, %v1472
      %v1475 = vmul.f32 0.5, %v1474
      %v1476 = vsub.f32 1.5, %v1475
      %v1477 = vmul.f32 %v1472, %v1476
      %v1478 = vmul.f32 %v823, %v1477
      %vm1479 = vcmp.eq.f32.partialorder %v823, inf
      %v1480 = vsel %vm1479, %v823, %v1478
      %vm1481 = vcmp.eq.f32.partialorder %v823, 0.0
      %v1482 = vand.u32 %v823, 2147483648
      %v1483 = vsel %vm1481, %v1482, %v1480
      %v1484 = vrsqrt.pop %v826
      %v1485 = vmul.f32 %v1484, %v826
      %v1486 = vmul.f32 %v1485, %v1484
      %v1487 = vmul.f32 0.5, %v1486
      %v1488 = vsub.f32 1.5, %v1487
      %v1489 = vmul.f32 %v1484, %v1488
      %v1490 = vmul.f32 %v826, %v1489
      %vm1491 = vcmp.eq.f32.partialorder %v826, inf
      %v1492 = vsel %vm1491, %v826, %v1490
      %vm1493 = vcmp.eq.f32.partialorder %v826, 0.0
      %v1494 = vand.u32 %v826, 2147483648
      %v1495 = vsel %vm1493, %v1494, %v1492
      %v1496 = vrsqrt.pop %v829
      %v1497 = vmul.f32 %v1496, %v829
      %v1498 = vmul.f32 %v1497, %v1496
      %v1499 = vmul.f32 0.5, %v1498
      %v1500 = vsub.f32 1.5, %v1499
      %v1501 = vmul.f32 %v1496, %v1500
      %v1502 = vmul.f32 %v829, %v1501
      %vm1503 = vcmp.eq.f32.partialorder %v829, inf
      %v1504 = vsel %vm1503, %v829, %v1502
      %vm1505 = vcmp.eq.f32.partialorder %v829, 0.0
      %v1506 = vand.u32 %v829, 2147483648
      %v1507 = vsel %vm1505, %v1506, %v1504
      %v1508 = vrsqrt.pop %v832
      %v1509 = vmul.f32 %v1508, %v832
      %v1510 = vmul.f32 %v1509, %v1508
      %v1511 = vmul.f32 0.5, %v1510
      %v1512 = vsub.f32 1.5, %v1511
      %v1513 = vmul.f32 %v1508, %v1512
      %v1514 = vmul.f32 %v832, %v1513
      %vm1515 = vcmp.eq.f32.partialorder %v832, inf
      %v1516 = vsel %vm1515, %v832, %v1514
      %vm1517 = vcmp.eq.f32.partialorder %v832, 0.0
      %v1518 = vand.u32 %v832, 2147483648
      %v1519 = vsel %vm1517, %v1518, %v1516
      %v1520 = vrsqrt.pop %v835
      %v1521 = vmul.f32 %v1520, %v835
      %v1522 = vmul.f32 %v1521, %v1520
      %v1523 = vmul.f32 0.5, %v1522
      %v1524 = vsub.f32 1.5, %v1523
      %v1525 = vmul.f32 %v1520, %v1524
      %v1526 = vmul.f32 %v835, %v1525
      %vm1527 = vcmp.eq.f32.partialorder %v835, inf
      %v1528 = vsel %vm1527, %v835, %v1526
      %vm1529 = vcmp.eq.f32.partialorder %v835, 0.0
      %v1530 = vand.u32 %v835, 2147483648
      %v1531 = vsel %vm1529, %v1530, %v1528
      %v1532 = vrsqrt.pop %v838
      %v1533 = vmul.f32 %v1532, %v838
      %v1534 = vmul.f32 %v1533, %v1532
      %v1535 = vmul.f32 0.5, %v1534
      %v1536 = vsub.f32 1.5, %v1535
      %v1537 = vmul.f32 %v1532, %v1536
      %v1538 = vmul.f32 %v838, %v1537
      %vm1539 = vcmp.eq.f32.partialorder %v838, inf
      %v1540 = vsel %vm1539, %v838, %v1538
      %vm1541 = vcmp.eq.f32.partialorder %v838, 0.0
      %v1542 = vand.u32 %v838, 2147483648
      %v1543 = vsel %vm1541, %v1542, %v1540
      %v1544 = vrsqrt.pop %v841
      %v1545 = vmul.f32 %v1544, %v841
      %v1546 = vmul.f32 %v1545, %v1544
      %v1547 = vmul.f32 0.5, %v1546
      %v1548 = vsub.f32 1.5, %v1547
      %v1549 = vmul.f32 %v1544, %v1548
      %v1550 = vmul.f32 %v841, %v1549
      %vm1551 = vcmp.eq.f32.partialorder %v841, inf
      %v1552 = vsel %vm1551, %v841, %v1550
      %vm1553 = vcmp.eq.f32.partialorder %v841, 0.0
      %v1554 = vand.u32 %v841, 2147483648
      %v1555 = vsel %vm1553, %v1554, %v1552
      %v1556 = vrsqrt.pop %v844
      %v1557 = vmul.f32 %v1556, %v844
      %v1558 = vmul.f32 %v1557, %v1556
      %v1559 = vmul.f32 0.5, %v1558
      %v1560 = vsub.f32 1.5, %v1559
      %v1561 = vmul.f32 %v1556, %v1560
      %v1562 = vmul.f32 %v844, %v1561
      %vm1563 = vcmp.eq.f32.partialorder %v844, inf
      %v1564 = vsel %vm1563, %v844, %v1562
      %vm1565 = vcmp.eq.f32.partialorder %v844, 0.0
      %v1566 = vand.u32 %v844, 2147483648
      %v1567 = vsel %vm1565, %v1566, %v1564
      %v1568 = vrsqrt.pop %v847
      %v1569 = vmul.f32 %v1568, %v847
      %v1570 = vmul.f32 %v1569, %v1568
      %v1571 = vmul.f32 0.5, %v1570
      %v1572 = vsub.f32 1.5, %v1571
      %v1573 = vmul.f32 %v1568, %v1572
      %v1574 = vmul.f32 %v847, %v1573
      %vm1575 = vcmp.eq.f32.partialorder %v847, inf
      %v1576 = vsel %vm1575, %v847, %v1574
      %vm1577 = vcmp.eq.f32.partialorder %v847, 0.0
      %v1578 = vand.u32 %v847, 2147483648
      %v1579 = vsel %vm1577, %v1578, %v1576
      %v1580 = vrsqrt.pop %v850
      %v1581 = vmul.f32 %v1580, %v850
      %v1582 = vmul.f32 %v1581, %v1580
      %v1583 = vmul.f32 0.5, %v1582
      %v1584 = vsub.f32 1.5, %v1583
      %v1585 = vmul.f32 %v1580, %v1584
      %v1586 = vmul.f32 %v850, %v1585
      %vm1587 = vcmp.eq.f32.partialorder %v850, inf
      %v1588 = vsel %vm1587, %v850, %v1586
      %vm1589 = vcmp.eq.f32.partialorder %v850, 0.0
      %v1590 = vand.u32 %v850, 2147483648
      %v1591 = vsel %vm1589, %v1590, %v1588
      %v1592 = vrsqrt.pop %v853
      %v1593 = vmul.f32 %v1592, %v853
      %v1594 = vmul.f32 %v1593, %v1592
      %v1595 = vmul.f32 0.5, %v1594
      %v1596 = vsub.f32 1.5, %v1595
      %v1597 = vmul.f32 %v1592, %v1596
      %v1598 = vmul.f32 %v853, %v1597
      %vm1599 = vcmp.eq.f32.partialorder %v853, inf
      %v1600 = vsel %vm1599, %v853, %v1598
      %vm1601 = vcmp.eq.f32.partialorder %v853, 0.0
      %v1602 = vand.u32 %v853, 2147483648
      %v1603 = vsel %vm1601, %v1602, %v1600
      %v1604 = vrsqrt.pop %v856
      %v1605 = vmul.f32 %v1604, %v856
      %v1606 = vmul.f32 %v1605, %v1604
      %v1607 = vmul.f32 0.5, %v1606
      %v1608 = vsub.f32 1.5, %v1607
      %v1609 = vmul.f32 %v1604, %v1608
      %v1610 = vmul.f32 %v856, %v1609
      %vm1611 = vcmp.eq.f32.partialorder %v856, inf
      %v1612 = vsel %vm1611, %v856, %v1610
      %vm1613 = vcmp.eq.f32.partialorder %v856, 0.0
      %v1614 = vand.u32 %v856, 2147483648
      %v1615 = vsel %vm1613, %v1614, %v1612
      %v1616 = vrsqrt.pop %v859
      %v1617 = vmul.f32 %v1616, %v859
      %v1618 = vmul.f32 %v1617, %v1616
      %v1619 = vmul.f32 0.5, %v1618
      %v1620 = vsub.f32 1.5, %v1619
      %v1621 = vmul.f32 %v1616, %v1620
      %v1622 = vmul.f32 %v859, %v1621
      %vm1623 = vcmp.eq.f32.partialorder %v859, inf
      %v1624 = vsel %vm1623, %v859, %v1622
      %vm1625 = vcmp.eq.f32.partialorder %v859, 0.0
      %v1626 = vand.u32 %v859, 2147483648
      %v1627 = vsel %vm1625, %v1626, %v1624
      %v1628 = vld [vmem:[%s3] sm:$0x3]
      %v1629 = vld [vmem:[%s4] sm:$0x1]
      %v1631 = vperm.slane %v1629, 0
      %v1633 = vmul.f32 %v871, %v1631
      %v1634 = vmul.f32 %v883, %v1631
      %v1635 = vmul.f32 %v895, %v1631
      %v1636 = vmul.f32 %v907, %v1631
      %v1637 = vmul.f32 %v919, %v1631
      %v1638 = vmul.f32 %v931, %v1631
      %v1639 = vmul.f32 %v943, %v1631
      %v1640 = vmul.f32 %v955, %v1631
      %v1641 = vmul.f32 %v967, %v1631
      %v1642 = vmul.f32 %v979, %v1631
      %v1643 = vmul.f32 %v991, %v1631
      %v1644 = vmul.f32 %v1003, %v1631
      %v1645 = vmul.f32 %v1015, %v1631
      %v1646 = vmul.f32 %v1027, %v1631
      %v1647 = vmul.f32 %v1039, %v1631
      %v1648 = vmul.f32 %v1051, %v1631
      %v1649 = vmul.f32 %v1063, %v1631
      %v1650 = vmul.f32 %v1075, %v1631
      %v1651 = vmul.f32 %v1087, %v1631
      %v1652 = vmul.f32 %v1099, %v1631
      %v1653 = vmul.f32 %v1111, %v1631
      %v1654 = vmul.f32 %v1123, %v1631
      %v1655 = vmul.f32 %v1135, %v1631
      %v1656 = vmul.f32 %v1147, %v1631
      %v1657 = vmul.f32 %v1159, %v1631
      %v1658 = vmul.f32 %v1171, %v1631
      %v1659 = vmul.f32 %v1183, %v1631
      %v1660 = vmul.f32 %v1195, %v1631
      %v1661 = vmul.f32 %v1207, %v1631
      %v1662 = vmul.f32 %v1219, %v1631
      %v1663 = vmul.f32 %v1231, %v1631
      %v1664 = vmul.f32 %v1243, %v1631
      %v1665 = vmul.f32 %v1255, %v1631
      %v1666 = vmul.f32 %v1267, %v1631
      %v1667 = vmul.f32 %v1279, %v1631
      %v1668 = vmul.f32 %v1291, %v1631
      %v1669 = vmul.f32 %v1303, %v1631
      %v1670 = vmul.f32 %v1315, %v1631
      %v1671 = vmul.f32 %v1327, %v1631
      %v1672 = vmul.f32 %v1339, %v1631
      %v1673 = vmul.f32 %v1351, %v1631
      %v1674 = vmul.f32 %v1363, %v1631
      %v1675 = vmul.f32 %v1375, %v1631
      %v1676 = vmul.f32 %v1387, %v1631
      %v1677 = vmul.f32 %v1399, %v1631
      %v1678 = vmul.f32 %v1411, %v1631
      %v1679 = vmul.f32 %v1423, %v1631
      %v1680 = vmul.f32 %v1435, %v1631
      %v1681 = vmul.f32 %v1447, %v1631
      %v1682 = vmul.f32 %v1459, %v1631
      %v1683 = vmul.f32 %v1471, %v1631
      %v1684 = vmul.f32 %v1483, %v1631
      %v1685 = vmul.f32 %v1495, %v1631
      %v1686 = vmul.f32 %v1507, %v1631
      %v1687 = vmul.f32 %v1519, %v1631
      %v1688 = vmul.f32 %v1531, %v1631
      %v1689 = vmul.f32 %v1543, %v1631
      %v1690 = vmul.f32 %v1555, %v1631
      %v1691 = vmul.f32 %v1567, %v1631
      %v1692 = vmul.f32 %v1579, %v1631
      %v1693 = vmul.f32 %v1591, %v1631
      %v1694 = vmul.f32 %v1603, %v1631
      %v1695 = vmul.f32 %v1615, %v1631
      %v1696 = vmul.f32 %v1627, %v1631
      %v1698 = vsel %vm667, %v539, 0
      %v1701 = vsel %vm667, %v540, 0
      %v1704 = vsel %vm667, %v541, 0
      %v1707 = vsel %vm667, %v542, 0
      %v1710 = vsel %vm667, %v543, 0
      %v1713 = vsel %vm667, %v544, 0
      %v1716 = vsel %vm667, %v545, 0
      %v1719 = vsel %vm667, %v546, 0
      %v1722 = vsel %vm667, %v547, 0
      %v1725 = vsel %vm667, %v548, 0
      %v1728 = vsel %vm667, %v549, 0
      %v1731 = vsel %vm667, %v550, 0
      %v1734 = vsel %vm667, %v551, 0
      %v1737 = vsel %vm667, %v552, 0
      %v1740 = vsel %vm667, %v553, 0
      %v1743 = vsel %vm667, %v554, 0
      %v1746 = vsel %vm667, %v555, 0
      %v1749 = vsel %vm667, %v556, 0
      %v1752 = vsel %vm667, %v557, 0
      %v1755 = vsel %vm667, %v558, 0
      %v1758 = vsel %vm667, %v559, 0
      %v1761 = vsel %vm667, %v560, 0
      %v1764 = vsel %vm667, %v561, 0
      %v1767 = vsel %vm667, %v562, 0
      %v1770 = vsel %vm667, %v563, 0
      %v1773 = vsel %vm667, %v564, 0
      %v1776 = vsel %vm667, %v565, 0
      %v1779 = vsel %vm667, %v566, 0
      %v1782 = vsel %vm667, %v567, 0
      %v1785 = vsel %vm667, %v568, 0
      %v1788 = vsel %vm667, %v569, 0
      %v1791 = vsel %vm667, %v570, 0
      %v1794 = vsel %vm667, %v571, 0
      %v1797 = vsel %vm667, %v572, 0
      %v1800 = vsel %vm667, %v573, 0
      %v1803 = vsel %vm667, %v574, 0
      %v1806 = vsel %vm667, %v575, 0
      %v1809 = vsel %vm667, %v576, 0
      %v1812 = vsel %vm667, %v577, 0
      %v1815 = vsel %vm667, %v578, 0
      %v1818 = vsel %vm667, %v579, 0
      %v1821 = vsel %vm667, %v580, 0
      %v1824 = vsel %vm667, %v581, 0
      %v1827 = vsel %vm667, %v582, 0
      %v1830 = vsel %vm667, %v583, 0
      %v1833 = vsel %vm667, %v584, 0
      %v1836 = vsel %vm667, %v585, 0
      %v1839 = vsel %vm667, %v586, 0
      %v1842 = vsel %vm667, %v587, 0
      %v1845 = vsel %vm667, %v588, 0
      %v1848 = vsel %vm667, %v589, 0
      %v1851 = vsel %vm667, %v590, 0
      %v1854 = vsel %vm667, %v591, 0
      %v1857 = vsel %vm667, %v592, 0
      %v1860 = vsel %vm667, %v593, 0
      %v1863 = vsel %vm667, %v594, 0
      %v1866 = vsel %vm667, %v595, 0
      %v1869 = vsel %vm667, %v596, 0
      %v1872 = vsel %vm667, %v597, 0
      %v1875 = vsel %vm667, %v598, 0
      %v1878 = vsel %vm667, %v599, 0
      %v1881 = vsel %vm667, %v600, 0
      %v1884 = vsel %vm667, %v601, 0
      %v1887 = vsel %vm667, %v602, 0
      %vm1889 = vcmask 1041408
      %v1891 = vsel %vm1889, %v1628, 0
      %1893 = vmatpush.msra.mxu0 0.0
      %1894 = vmatpush.msra.mxu0 0.0
      %1895 = vmatpush.msra.mxu0 0.0
      %1896 = vmatpush.msra.mxu0 0.0
      %1897 = vmatpush.msra.mxu0 0.0
      %1898 = vmatpush.msra.mxu0 0.0
      %1899 = vmatpush.msra.mxu0 0.0
      %1900 = vmatpush.msra.mxu0 0.0
      %1901 = vmatpush.msra.mxu0 0.0
      %1902 = vmatpush.msra.mxu0 0.0
      %1903 = vmatpush.msra.mxu0 0.0
      %1904 = vmatpush.msra.mxu0 0.0
      %1905 = vmatpush.msra.mxu0 0.0
      %1906 = vmatpush.msra.mxu0 0.0
      %1907 = vmatpush.msra.mxu0 0.0
      %1908 = vmatpush.msra.mxu0 %v1891
      %1909 = vmatmul.f32.gmra.mxu0 %v1698
      %v1910 = vpop.f32.mrf.mxu0
      %v1911 = vadd.f32 %v1633, %v1910
      %1912 = vmatmul.f32.gmra.mxu0 %v1701
      %v1913 = vpop.f32.mrf.mxu0
      %v1914 = vadd.f32 %v1634, %v1913
      %1915 = vmatmul.f32.gmra.mxu0 %v1704
      %v1916 = vpop.f32.mrf.mxu0
      %v1917 = vadd.f32 %v1635, %v1916
      %1918 = vmatmul.f32.gmra.mxu0 %v1707
      %v1919 = vpop.f32.mrf.mxu0
      %v1920 = vadd.f32 %v1636, %v1919
      %1921 = vmatmul.f32.gmra.mxu0 %v1710
      %v1922 = vpop.f32.mrf.mxu0
      %v1923 = vadd.f32 %v1637, %v1922
      %1924 = vmatmul.f32.gmra.mxu0 %v1713
      %v1925 = vpop.f32.mrf.mxu0
      %v1926 = vadd.f32 %v1638, %v1925
      %1927 = vmatmul.f32.gmra.mxu0 %v1716
      %v1928 = vpop.f32.mrf.mxu0
      %v1929 = vadd.f32 %v1639, %v1928
      %1930 = vmatmul.f32.gmra.mxu0 %v1719
      %v1931 = vpop.f32.mrf.mxu0
      %v1932 = vadd.f32 %v1640, %v1931
      %1933 = vmatmul.f32.gmra.mxu0 %v1722
      %v1934 = vpop.f32.mrf.mxu0
      %v1935 = vadd.f32 %v1641, %v1934
      %1936 = vmatmul.f32.gmra.mxu0 %v1725
      %v1937 = vpop.f32.mrf.mxu0
      %v1938 = vadd.f32 %v1642, %v1937
      %1939 = vmatmul.f32.gmra.mxu0 %v1728
      %v1940 = vpop.f32.mrf.mxu0
      %v1941 = vadd.f32 %v1643, %v1940
      %1942 = vmatmul.f32.gmra.mxu0 %v1731
      %v1943 = vpop.f32.mrf.mxu0
      %v1944 = vadd.f32 %v1644, %v1943
      %1945 = vmatmul.f32.gmra.mxu0 %v1734
      %v1946 = vpop.f32.mrf.mxu0
      %v1947 = vadd.f32 %v1645, %v1946
      %1948 = vmatmul.f32.gmra.mxu0 %v1737
      %v1949 = vpop.f32.mrf.mxu0
      %v1950 = vadd.f32 %v1646, %v1949
      %1951 = vmatmul.f32.gmra.mxu0 %v1740
      %v1952 = vpop.f32.mrf.mxu0
      %v1953 = vadd.f32 %v1647, %v1952
      %1954 = vmatmul.f32.gmra.mxu0 %v1743
      %v1955 = vpop.f32.mrf.mxu0
      %v1956 = vadd.f32 %v1648, %v1955
      %1957 = vmatmul.f32.gmra.mxu0 %v1746
      %v1958 = vpop.f32.mrf.mxu0
      %v1959 = vadd.f32 %v1649, %v1958
      %1960 = vmatmul.f32.gmra.mxu0 %v1749
      %v1961 = vpop.f32.mrf.mxu0
      %v1962 = vadd.f32 %v1650, %v1961
      %1963 = vmatmul.f32.gmra.mxu0 %v1752
      %v1964 = vpop.f32.mrf.mxu0
      %v1965 = vadd.f32 %v1651, %v1964
      %1966 = vmatmul.f32.gmra.mxu0 %v1755
      %v1967 = vpop.f32.mrf.mxu0
      %v1968 = vadd.f32 %v1652, %v1967
      %1969 = vmatmul.f32.gmra.mxu0 %v1758
      %v1970 = vpop.f32.mrf.mxu0
      %v1971 = vadd.f32 %v1653, %v1970
      %1972 = vmatmul.f32.gmra.mxu0 %v1761
      %v1973 = vpop.f32.mrf.mxu0
      %v1974 = vadd.f32 %v1654, %v1973
      %1975 = vmatmul.f32.gmra.mxu0 %v1764
      %v1976 = vpop.f32.mrf.mxu0
      %v1977 = vadd.f32 %v1655, %v1976
      %1978 = vmatmul.f32.gmra.mxu0 %v1767
      %v1979 = vpop.f32.mrf.mxu0
      %v1980 = vadd.f32 %v1656, %v1979
      %1981 = vmatmul.f32.gmra.mxu0 %v1770
      %v1982 = vpop.f32.mrf.mxu0
      %v1983 = vadd.f32 %v1657, %v1982
      %1984 = vmatmul.f32.gmra.mxu0 %v1773
      %v1985 = vpop.f32.mrf.mxu0
      %v1986 = vadd.f32 %v1658, %v1985
      %1987 = vmatmul.f32.gmra.mxu0 %v1776
      %v1988 = vpop.f32.mrf.mxu0
      %v1989 = vadd.f32 %v1659, %v1988
      %1990 = vmatmul.f32.gmra.mxu0 %v1779
      %v1991 = vpop.f32.mrf.mxu0
      %v1992 = vadd.f32 %v1660, %v1991
      %1993 = vmatmul.f32.gmra.mxu0 %v1782
      %v1994 = vpop.f32.mrf.mxu0
      %v1995 = vadd.f32 %v1661, %v1994
      %1996 = vmatmul.f32.gmra.mxu0 %v1785
      %v1997 = vpop.f32.mrf.mxu0
      %v1998 = vadd.f32 %v1662, %v1997
      %1999 = vmatmul.f32.gmra.mxu0 %v1788
      %v2000 = vpop.f32.mrf.mxu0
      %v2001 = vadd.f32 %v1663, %v2000
      %2002 = vmatmul.f32.gmra.mxu0 %v1791
      %v2003 = vpop.f32.mrf.mxu0
      %v2004 = vadd.f32 %v1664, %v2003
      %2005 = vmatmul.f32.gmra.mxu0 %v1794
      %v2006 = vpop.f32.mrf.mxu0
      %v2007 = vadd.f32 %v1665, %v2006
      %2008 = vmatmul.f32.gmra.mxu0 %v1797
      %v2009 = vpop.f32.mrf.mxu0
      %v2010 = vadd.f32 %v1666, %v2009
      %2011 = vmatmul.f32.gmra.mxu0 %v1800
      %v2012 = vpop.f32.mrf.mxu0
      %v2013 = vadd.f32 %v1667, %v2012
      %2014 = vmatmul.f32.gmra.mxu0 %v1803
      %v2015 = vpop.f32.mrf.mxu0
      %v2016 = vadd.f32 %v1668, %v2015
      %2017 = vmatmul.f32.gmra.mxu0 %v1806
      %v2018 = vpop.f32.mrf.mxu0
      %v2019 = vadd.f32 %v1669, %v2018
      %2020 = vmatmul.f32.gmra.mxu0 %v1809
      %v2021 = vpop.f32.mrf.mxu0
      %v2022 = vadd.f32 %v1670, %v2021
      %2023 = vmatmul.f32.gmra.mxu0 %v1812
      %v2024 = vpop.f32.mrf.mxu0
      %v2025 = vadd.f32 %v1671, %v2024
      %2026 = vmatmul.f32.gmra.mxu0 %v1815
      %v2027 = vpop.f32.mrf.mxu0
      %v2028 = vadd.f32 %v1672, %v2027
      %2029 = vmatmul.f32.gmra.mxu0 %v1818
      %v2030 = vpop.f32.mrf.mxu0
      %v2031 = vadd.f32 %v1673, %v2030
      %2032 = vmatmul.f32.gmra.mxu0 %v1821
      %v2033 = vpop.f32.mrf.mxu0
      %v2034 = vadd.f32 %v1674, %v2033
      %2035 = vmatmul.f32.gmra.mxu0 %v1824
      %v2036 = vpop.f32.mrf.mxu0
      %v2037 = vadd.f32 %v1675, %v2036
      %2038 = vmatmul.f32.gmra.mxu0 %v1827
      %v2039 = vpop.f32.mrf.mxu0
      %v2040 = vadd.f32 %v1676, %v2039
      %2041 = vmatmul.f32.gmra.mxu0 %v1830
      %v2042 = vpop.f32.mrf.mxu0
      %v2043 = vadd.f32 %v1677, %v2042
      %2044 = vmatmul.f32.gmra.mxu0 %v1833
      %v2045 = vpop.f32.mrf.mxu0
      %v2046 = vadd.f32 %v1678, %v2045
      %2047 = vmatmul.f32.gmra.mxu0 %v1836
      %v2048 = vpop.f32.mrf.mxu0
      %v2049 = vadd.f32 %v1679, %v2048
      %2050 = vmatmul.f32.gmra.mxu0 %v1839
      %v2051 = vpop.f32.mrf.mxu0
      %v2052 = vadd.f32 %v1680, %v2051
      %2053 = vmatmul.f32.gmra.mxu0 %v1842
      %v2054 = vpop.f32.mrf.mxu0
      %v2055 = vadd.f32 %v1681, %v2054
      %2056 = vmatmul.f32.gmra.mxu0 %v1845
      %v2057 = vpop.f32.mrf.mxu0
      %v2058 = vadd.f32 %v1682, %v2057
      %2059 = vmatmul.f32.gmra.mxu0 %v1848
      %v2060 = vpop.f32.mrf.mxu0
      %v2061 = vadd.f32 %v1683, %v2060
      %2062 = vmatmul.f32.gmra.mxu0 %v1851
      %v2063 = vpop.f32.mrf.mxu0
      %v2064 = vadd.f32 %v1684, %v2063
      %2065 = vmatmul.f32.gmra.mxu0 %v1854
      %v2066 = vpop.f32.mrf.mxu0
      %v2067 = vadd.f32 %v1685, %v2066
      %2068 = vmatmul.f32.gmra.mxu0 %v1857
      %v2069 = vpop.f32.mrf.mxu0
      %v2070 = vadd.f32 %v1686, %v2069
      %2071 = vmatmul.f32.gmra.mxu0 %v1860
      %v2072 = vpop.f32.mrf.mxu0
      %v2073 = vadd.f32 %v1687, %v2072
      %2074 = vmatmul.f32.gmra.mxu0 %v1863
      %v2075 = vpop.f32.mrf.mxu0
      %v2076 = vadd.f32 %v1688, %v2075
      %2077 = vmatmul.f32.gmra.mxu0 %v1866
      %v2078 = vpop.f32.mrf.mxu0
      %v2079 = vadd.f32 %v1689, %v2078
      %2080 = vmatmul.f32.gmra.mxu0 %v1869
      %v2081 = vpop.f32.mrf.mxu0
      %v2082 = vadd.f32 %v1690, %v2081
      %2083 = vmatmul.f32.gmra.mxu0 %v1872
      %v2084 = vpop.f32.mrf.mxu0
      %v2085 = vadd.f32 %v1691, %v2084
      %2086 = vmatmul.f32.gmra.mxu0 %v1875
      %v2087 = vpop.f32.mrf.mxu0
      %v2088 = vadd.f32 %v1692, %v2087
      %2089 = vmatmul.f32.gmra.mxu0 %v1878
      %v2090 = vpop.f32.mrf.mxu0
      %v2091 = vadd.f32 %v1693, %v2090
      %2092 = vmatmul.f32.gmra.mxu0 %v1881
      %v2093 = vpop.f32.mrf.mxu0
      %v2094 = vadd.f32 %v1694, %v2093
      %2095 = vmatmul.f32.gmra.mxu0 %v1884
      %v2096 = vpop.f32.mrf.mxu0
      %v2097 = vadd.f32 %v1695, %v2096
      %2098 = vmatmul.f32.gmra.mxu0 %v1887
      %v2099 = vpop.f32.mrf.mxu0
      %v2100 = vadd.f32 %v1696, %v2099
      %2101 = vdwg.mxu0
      %v2102 = vld [vmem:[%s5] sm:$0x1]
      %v2104 = vperm.slane %v2102, 0
      %v2106 = vadd.f32 %v1911, %v2104
      %v2107 = vadd.f32 %v1914, %v2104
      %v2108 = vadd.f32 %v1917, %v2104
      %v2109 = vadd.f32 %v1920, %v2104
      %v2110 = vadd.f32 %v1923, %v2104
      %v2111 = vadd.f32 %v1926, %v2104
      %v2112 = vadd.f32 %v1929, %v2104
      %v2113 = vadd.f32 %v1932, %v2104
      %v2114 = vadd.f32 %v1935, %v2104
      %v2115 = vadd.f32 %v1938, %v2104
      %v2116 = vadd.f32 %v1941, %v2104
      %v2117 = vadd.f32 %v1944, %v2104
      %v2118 = vadd.f32 %v1947, %v2104
      %v2119 = vadd.f32 %v1950, %v2104
      %v2120 = vadd.f32 %v1953, %v2104
      %v2121 = vadd.f32 %v1956, %v2104
      %v2122 = vadd.f32 %v1959, %v2104
      %v2123 = vadd.f32 %v1962, %v2104
      %v2124 = vadd.f32 %v1965, %v2104
      %v2125 = vadd.f32 %v1968, %v2104
      %v2126 = vadd.f32 %v1971, %v2104
      %v2127 = vadd.f32 %v1974, %v2104
      %v2128 = vadd.f32 %v1977, %v2104
      %v2129 = vadd.f32 %v1980, %v2104
      %v2130 = vadd.f32 %v1983, %v2104
      %v2131 = vadd.f32 %v1986, %v2104
      %v2132 = vadd.f32 %v1989, %v2104
      %v2133 = vadd.f32 %v1992, %v2104
      %v2134 = vadd.f32 %v1995, %v2104
      %v2135 = vadd.f32 %v1998, %v2104
      %v2136 = vadd.f32 %v2001, %v2104
      %v2137 = vadd.f32 %v2004, %v2104
      %v2138 = vadd.f32 %v2007, %v2104
      %v2139 = vadd.f32 %v2010, %v2104
      %v2140 = vadd.f32 %v2013, %v2104
      %v2141 = vadd.f32 %v2016, %v2104
      %v2142 = vadd.f32 %v2019, %v2104
      %v2143 = vadd.f32 %v2022, %v2104
      %v2144 = vadd.f32 %v2025, %v2104
      %v2145 = vadd.f32 %v2028, %v2104
      %v2146 = vadd.f32 %v2031, %v2104
      %v2147 = vadd.f32 %v2034, %v2104
      %v2148 = vadd.f32 %v2037, %v2104
      %v2149 = vadd.f32 %v2040, %v2104
      %v2150 = vadd.f32 %v2043, %v2104
      %v2151 = vadd.f32 %v2046, %v2104
      %v2152 = vadd.f32 %v2049, %v2104
      %v2153 = vadd.f32 %v2052, %v2104
      %v2154 = vadd.f32 %v2055, %v2104
      %v2155 = vadd.f32 %v2058, %v2104
      %v2156 = vadd.f32 %v2061, %v2104
      %v2157 = vadd.f32 %v2064, %v2104
      %v2158 = vadd.f32 %v2067, %v2104
      %v2159 = vadd.f32 %v2070, %v2104
      %v2160 = vadd.f32 %v2073, %v2104
      %v2161 = vadd.f32 %v2076, %v2104
      %v2162 = vadd.f32 %v2079, %v2104
      %v2163 = vadd.f32 %v2082, %v2104
      %v2164 = vadd.f32 %v2085, %v2104
      %v2165 = vadd.f32 %v2088, %v2104
      %v2166 = vadd.f32 %v2091, %v2104
      %v2167 = vadd.f32 %v2094, %v2104
      %v2168 = vadd.f32 %v2097, %v2104
      %v2169 = vadd.f32 %v2100, %v2104
      %v2170 = vmax.f32 %v2106, 0.0
      %v2171 = vmax.f32 %v2107, 0.0
      %v2172 = vmax.f32 %v2108, 0.0
      %v2173 = vmax.f32 %v2109, 0.0
      %v2174 = vmax.f32 %v2110, 0.0
      %v2175 = vmax.f32 %v2111, 0.0
      %v2176 = vmax.f32 %v2112, 0.0
      %v2177 = vmax.f32 %v2113, 0.0
      %v2178 = vmax.f32 %v2114, 0.0
      %v2179 = vmax.f32 %v2115, 0.0
      %v2180 = vmax.f32 %v2116, 0.0
      %v2181 = vmax.f32 %v2117, 0.0
      %v2182 = vmax.f32 %v2118, 0.0
      %v2183 = vmax.f32 %v2119, 0.0
      %v2184 = vmax.f32 %v2120, 0.0
      %v2185 = vmax.f32 %v2121, 0.0
      %v2186 = vmax.f32 %v2122, 0.0
      %v2187 = vmax.f32 %v2123, 0.0
      %v2188 = vmax.f32 %v2124, 0.0
      %v2189 = vmax.f32 %v2125, 0.0
      %v2190 = vmax.f32 %v2126, 0.0
      %v2191 = vmax.f32 %v2127, 0.0
      %v2192 = vmax.f32 %v2128, 0.0
      %v2193 = vmax.f32 %v2129, 0.0
      %v2194 = vmax.f32 %v2130, 0.0
      %v2195 = vmax.f32 %v2131, 0.0
      %v2196 = vmax.f32 %v2132, 0.0
      %v2197 = vmax.f32 %v2133, 0.0
      %v2198 = vmax.f32 %v2134, 0.0
      %v2199 = vmax.f32 %v2135, 0.0
      %v2200 = vmax.f32 %v2136, 0.0
      %v2201 = vmax.f32 %v2137, 0.0
      %v2202 = vmax.f32 %v2138, 0.0
      %v2203 = vmax.f32 %v2139, 0.0
      %v2204 = vmax.f32 %v2140, 0.0
      %v2205 = vmax.f32 %v2141, 0.0
      %v2206 = vmax.f32 %v2142, 0.0
      %v2207 = vmax.f32 %v2143, 0.0
      %v2208 = vmax.f32 %v2144, 0.0
      %v2209 = vmax.f32 %v2145, 0.0
      %v2210 = vmax.f32 %v2146, 0.0
      %v2211 = vmax.f32 %v2147, 0.0
      %v2212 = vmax.f32 %v2148, 0.0
      %v2213 = vmax.f32 %v2149, 0.0
      %v2214 = vmax.f32 %v2150, 0.0
      %v2215 = vmax.f32 %v2151, 0.0
      %v2216 = vmax.f32 %v2152, 0.0
      %v2217 = vmax.f32 %v2153, 0.0
      %v2218 = vmax.f32 %v2154, 0.0
      %v2219 = vmax.f32 %v2155, 0.0
      %v2220 = vmax.f32 %v2156, 0.0
      %v2221 = vmax.f32 %v2157, 0.0
      %v2222 = vmax.f32 %v2158, 0.0
      %v2223 = vmax.f32 %v2159, 0.0
      %v2224 = vmax.f32 %v2160, 0.0
      %v2225 = vmax.f32 %v2161, 0.0
      %v2226 = vmax.f32 %v2162, 0.0
      %v2227 = vmax.f32 %v2163, 0.0
      %v2228 = vmax.f32 %v2164, 0.0
      %v2229 = vmax.f32 %v2165, 0.0
      %v2230 = vmax.f32 %v2166, 0.0
      %v2231 = vmax.f32 %v2167, 0.0
      %v2232 = vmax.f32 %v2168, 0.0
      %v2233 = vmax.f32 %v2169, 0.0
      %v2234 = vld [vmem:[%s6] sm:$0xff]
      %v2235 = vld [vmem:[%s6 + $0x8] sm:$0xff]
      %v2236 = vld [vmem:[%s6 + $0x10] sm:$0xff]
      %v2237 = vld [vmem:[%s6 + $0x18] sm:$0xff]
      %v2238 = vld [vmem:[%s7] sm:$0x1]
      %v2240 = vperm.slane %v2238, 0
      %vm2242 = vcmask 261120
      %v2244 = vsel %vm2242, %v2170, 0
      %v2247 = vsel %vm2242, %v2171, 0
      %v2250 = vsel %vm2242, %v2172, 0
      %v2253 = vsel %vm2242, %v2173, 0
      %v2256 = vsel %vm2242, %v2174, 0
      %v2259 = vsel %vm2242, %v2175, 0
      %v2262 = vsel %vm2242, %v2176, 0
      %v2265 = vsel %vm2242, %v2177, 0
      %v2268 = vsel %vm2242, %v2178, 0
      %v2271 = vsel %vm2242, %v2179, 0
      %v2274 = vsel %vm2242, %v2180, 0
      %v2277 = vsel %vm2242, %v2181, 0
      %v2280 = vsel %vm2242, %v2182, 0
      %v2283 = vsel %vm2242, %v2183, 0
      %v2286 = vsel %vm2242, %v2184, 0
      %v2289 = vsel %vm2242, %v2185, 0
      %v2292 = vsel %vm2242, %v2186, 0
      %v2295 = vsel %vm2242, %v2187, 0
      %v2298 = vsel %vm2242, %v2188, 0
      %v2301 = vsel %vm2242, %v2189, 0
      %v2304 = vsel %vm2242, %v2190, 0
      %v2307 = vsel %vm2242, %v2191, 0
      %v2310 = vsel %vm2242, %v2192, 0
      %v2313 = vsel %vm2242, %v2193, 0
      %v2316 = vsel %vm2242, %v2194, 0
      %v2319 = vsel %vm2242, %v2195, 0
      %v2322 = vsel %vm2242, %v2196, 0
      %v2325 = vsel %vm2242, %v2197, 0
      %v2328 = vsel %vm2242, %v2198, 0
      %v2331 = vsel %vm2242, %v2199, 0
      %v2334 = vsel %vm2242, %v2200, 0
      %v2337 = vsel %vm2242, %v2201, 0
      %v2340 = vsel %vm2242, %v2202, 0
      %v2343 = vsel %vm2242, %v2203, 0
      %v2346 = vsel %vm2242, %v2204, 0
      %v2349 = vsel %vm2242, %v2205, 0
      %v2352 = vsel %vm2242, %v2206, 0
      %v2355 = vsel %vm2242, %v2207, 0
      %v2358 = vsel %vm2242, %v2208, 0
      %v2361 = vsel %vm2242, %v2209, 0
      %v2364 = vsel %vm2242, %v2210, 0
      %v2367 = vsel %vm2242, %v2211, 0
      %v2370 = vsel %vm2242, %v2212, 0
      %v2373 = vsel %vm2242, %v2213, 0
      %v2376 = vsel %vm2242, %v2214, 0
      %v2379 = vsel %vm2242, %v2215, 0
      %v2382 = vsel %vm2242, %v2216, 0
      %v2385 = vsel %vm2242, %v2217, 0
      %v2388 = vsel %vm2242, %v2218, 0
      %v2391 = vsel %vm2242, %v2219, 0
      %v2394 = vsel %vm2242, %v2220, 0
      %v2397 = vsel %vm2242, %v2221, 0
      %v2400 = vsel %vm2242, %v2222, 0
      %v2403 = vsel %vm2242, %v2223, 0
      %v2406 = vsel %vm2242, %v2224, 0
      %v2409 = vsel %vm2242, %v2225, 0
      %v2412 = vsel %vm2242, %v2226, 0
      %v2415 = vsel %vm2242, %v2227, 0
      %v2418 = vsel %vm2242, %v2228, 0
      %v2421 = vsel %vm2242, %v2229, 0
      %v2424 = vsel %vm2242, %v2230, 0
      %v2427 = vsel %vm2242, %v2231, 0
      %v2430 = vsel %vm2242, %v2232, 0
      %v2433 = vsel %vm2242, %v2233, 0
      %2435 = vmatpush.msra.mxu0 0.0
      %2436 = vmatpush.msra.mxu0 0.0
      %2437 = vmatpush.msra.mxu0 0.0
      %2438 = vmatpush.msra.mxu0 0.0
      %2439 = vmatpush.msra.mxu0 0.0
      %2440 = vmatpush.msra.mxu0 0.0
      %2441 = vmatpush.msra.mxu0 0.0
      %2442 = vmatpush.msra.mxu0 0.0
      %2443 = vmatpush.msra.mxu0 0.0
      %2444 = vmatpush.msra.mxu0 0.0
      %2445 = vmatpush.msra.mxu0 0.0
      %2446 = vmatpush.msra.mxu0 0.0
      %2447 = vmatpush.msra.mxu0 %v2237
      %2448 = vmatpush.msra.mxu0 %v2236
      %2449 = vmatpush.msra.mxu0 %v2235
      %2450 = vmatpush.msra.mxu0 %v2234
      %2451 = vmatmul.f32.gmra.mxu0 %v2244
      %v2452 = vpop.f32.mrf.mxu0
      %v2453 = vadd.f32 %v2240, %v2452
      %2454 = vmatmul.f32.gmra.mxu0 %v2247
      %v2455 = vpop.f32.mrf.mxu0
      %v2456 = vadd.f32 %v2240, %v2455
      %2457 = vmatmul.f32.gmra.mxu0 %v2250
      %v2458 = vpop.f32.mrf.mxu0
      %v2459 = vadd.f32 %v2240, %v2458
      %2460 = vmatmul.f32.gmra.mxu0 %v2253
      %v2461 = vpop.f32.mrf.mxu0
      %v2462 = vadd.f32 %v2240, %v2461
      %2463 = vmatmul.f32.gmra.mxu0 %v2256
      %v2464 = vpop.f32.mrf.mxu0
      %v2465 = vadd.f32 %v2240, %v2464
      %2466 = vmatmul.f32.gmra.mxu0 %v2259
      %v2467 = vpop.f32.mrf.mxu0
      %v2468 = vadd.f32 %v2240, %v2467
      %2469 = vmatmul.f32.gmra.mxu0 %v2262
      %v2470 = vpop.f32.mrf.mxu0
      %v2471 = vadd.f32 %v2240, %v2470
      %2472 = vmatmul.f32.gmra.mxu0 %v2265
      %v2473 = vpop.f32.mrf.mxu0
      %v2474 = vadd.f32 %v2240, %v2473
      %2475 = vmatmul.f32.gmra.mxu0 %v2268
      %v2476 = vpop.f32.mrf.mxu0
      %v2477 = vadd.f32 %v2240, %v2476
      %2478 = vmatmul.f32.gmra.mxu0 %v2271
      %v2479 = vpop.f32.mrf.mxu0
      %v2480 = vadd.f32 %v2240, %v2479
      %2481 = vmatmul.f32.gmra.mxu0 %v2274
      %v2482 = vpop.f32.mrf.mxu0
      %v2483 = vadd.f32 %v2240, %v2482
      %2484 = vmatmul.f32.gmra.mxu0 %v2277
      %v2485 = vpop.f32.mrf.mxu0
      %v2486 = vadd.f32 %v2240, %v2485
      %2487 = vmatmul.f32.gmra.mxu0 %v2280
      %v2488 = vpop.f32.mrf.mxu0
      %v2489 = vadd.f32 %v2240, %v2488
      %2490 = vmatmul.f32.gmra.mxu0 %v2283
      %v2491 = vpop.f32.mrf.mxu0
      %v2492 = vadd.f32 %v2240, %v2491
      %2493 = vmatmul.f32.gmra.mxu0 %v2286
      %v2494 = vpop.f32.mrf.mxu0
      %v2495 = vadd.f32 %v2240, %v2494
      %2496 = vmatmul.f32.gmra.mxu0 %v2289
      %v2497 = vpop.f32.mrf.mxu0
      %v2498 = vadd.f32 %v2240, %v2497
      %2499 = vmatmul.f32.gmra.mxu0 %v2292
      %v2500 = vpop.f32.mrf.mxu0
      %v2501 = vadd.f32 %v2240, %v2500
      %2502 = vmatmul.f32.gmra.mxu0 %v2295
      %v2503 = vpop.f32.mrf.mxu0
      %v2504 = vadd.f32 %v2240, %v2503
      %2505 = vmatmul.f32.gmra.mxu0 %v2298
      %v2506 = vpop.f32.mrf.mxu0
      %v2507 = vadd.f32 %v2240, %v2506
      %2508 = vmatmul.f32.gmra.mxu0 %v2301
      %v2509 = vpop.f32.mrf.mxu0
      %v2510 = vadd.f32 %v2240, %v2509
      %2511 = vmatmul.f32.gmra.mxu0 %v2304
      %v2512 = vpop.f32.mrf.mxu0
      %v2513 = vadd.f32 %v2240, %v2512
      %2514 = vmatmul.f32.gmra.mxu0 %v2307
      %v2515 = vpop.f32.mrf.mxu0
      %v2516 = vadd.f32 %v2240, %v2515
      %2517 = vmatmul.f32.gmra.mxu0 %v2310
      %v2518 = vpop.f32.mrf.mxu0
      %v2519 = vadd.f32 %v2240, %v2518
      %2520 = vmatmul.f32.gmra.mxu0 %v2313
      %v2521 = vpop.f32.mrf.mxu0
      %v2522 = vadd.f32 %v2240, %v2521
      %2523 = vmatmul.f32.gmra.mxu0 %v2316
      %v2524 = vpop.f32.mrf.mxu0
      %v2525 = vadd.f32 %v2240, %v2524
      %2526 = vmatmul.f32.gmra.mxu0 %v2319
      %v2527 = vpop.f32.mrf.mxu0
      %v2528 = vadd.f32 %v2240, %v2527
      %2529 = vmatmul.f32.gmra.mxu0 %v2322
      %v2530 = vpop.f32.mrf.mxu0
      %v2531 = vadd.f32 %v2240, %v2530
      %2532 = vmatmul.f32.gmra.mxu0 %v2325
      %v2533 = vpop.f32.mrf.mxu0
      %v2534 = vadd.f32 %v2240, %v2533
      %2535 = vmatmul.f32.gmra.mxu0 %v2328
      %v2536 = vpop.f32.mrf.mxu0
      %v2537 = vadd.f32 %v2240, %v2536
      %2538 = vmatmul.f32.gmra.mxu0 %v2331
      %v2539 = vpop.f32.mrf.mxu0
      %v2540 = vadd.f32 %v2240, %v2539
      %2541 = vmatmul.f32.gmra.mxu0 %v2334
      %v2542 = vpop.f32.mrf.mxu0
      %v2543 = vadd.f32 %v2240, %v2542
      %2544 = vmatmul.f32.gmra.mxu0 %v2337
      %v2545 = vpop.f32.mrf.mxu0
      %v2546 = vadd.f32 %v2240, %v2545
      %2547 = vmatmul.f32.gmra.mxu0 %v2340
      %v2548 = vpop.f32.mrf.mxu0
      %v2549 = vadd.f32 %v2240, %v2548
      %2550 = vmatmul.f32.gmra.mxu0 %v2343
      %v2551 = vpop.f32.mrf.mxu0
      %v2552 = vadd.f32 %v2240, %v2551
      %2553 = vmatmul.f32.gmra.mxu0 %v2346
      %v2554 = vpop.f32.mrf.mxu0
      %v2555 = vadd.f32 %v2240, %v2554
      %2556 = vmatmul.f32.gmra.mxu0 %v2349
      %v2557 = vpop.f32.mrf.mxu0
      %v2558 = vadd.f32 %v2240, %v2557
      %2559 = vmatmul.f32.gmra.mxu0 %v2352
      %v2560 = vpop.f32.mrf.mxu0
      %v2561 = vadd.f32 %v2240, %v2560
      %2562 = vmatmul.f32.gmra.mxu0 %v2355
      %v2563 = vpop.f32.mrf.mxu0
      %v2564 = vadd.f32 %v2240, %v2563
      %2565 = vmatmul.f32.gmra.mxu0 %v2358
      %v2566 = vpop.f32.mrf.mxu0
      %v2567 = vadd.f32 %v2240, %v2566
      %2568 = vmatmul.f32.gmra.mxu0 %v2361
      %v2569 = vpop.f32.mrf.mxu0
      %v2570 = vadd.f32 %v2240, %v2569
      %2571 = vmatmul.f32.gmra.mxu0 %v2364
      %v2572 = vpop.f32.mrf.mxu0
      %v2573 = vadd.f32 %v2240, %v2572
      %2574 = vmatmul.f32.gmra.mxu0 %v2367
      %v2575 = vpop.f32.mrf.mxu0
      %v2576 = vadd.f32 %v2240, %v2575
      %2577 = vmatmul.f32.gmra.mxu0 %v2370
      %v2578 = vpop.f32.mrf.mxu0
      %v2579 = vadd.f32 %v2240, %v2578
      %2580 = vmatmul.f32.gmra.mxu0 %v2373
      %v2581 = vpop.f32.mrf.mxu0
      %v2582 = vadd.f32 %v2240, %v2581
      %2583 = vmatmul.f32.gmra.mxu0 %v2376
      %v2584 = vpop.f32.mrf.mxu0
      %v2585 = vadd.f32 %v2240, %v2584
      %2586 = vmatmul.f32.gmra.mxu0 %v2379
      %v2587 = vpop.f32.mrf.mxu0
      %v2588 = vadd.f32 %v2240, %v2587
      %2589 = vmatmul.f32.gmra.mxu0 %v2382
      %v2590 = vpop.f32.mrf.mxu0
      %v2591 = vadd.f32 %v2240, %v2590
      %2592 = vmatmul.f32.gmra.mxu0 %v2385
      %v2593 = vpop.f32.mrf.mxu0
      %v2594 = vadd.f32 %v2240, %v2593
      %2595 = vmatmul.f32.gmra.mxu0 %v2388
      %v2596 = vpop.f32.mrf.mxu0
      %v2597 = vadd.f32 %v2240, %v2596
      %2598 = vmatmul.f32.gmra.mxu0 %v2391
      %v2599 = vpop.f32.mrf.mxu0
      %v2600 = vadd.f32 %v2240, %v2599
      %2601 = vmatmul.f32.gmra.mxu0 %v2394
      %v2602 = vpop.f32.mrf.mxu0
      %v2603 = vadd.f32 %v2240, %v2602
      %2604 = vmatmul.f32.gmra.mxu0 %v2397
      %v2605 = vpop.f32.mrf.mxu0
      %v2606 = vadd.f32 %v2240, %v2605
      %2607 = vmatmul.f32.gmra.mxu0 %v2400
      %v2608 = vpop.f32.mrf.mxu0
      %v2609 = vadd.f32 %v2240, %v2608
      %2610 = vmatmul.f32.gmra.mxu0 %v2403
      %v2611 = vpop.f32.mrf.mxu0
      %v2612 = vadd.f32 %v2240, %v2611
      %2613 = vmatmul.f32.gmra.mxu0 %v2406
      %v2614 = vpop.f32.mrf.mxu0
      %v2615 = vadd.f32 %v2240, %v2614
      %2616 = vmatmul.f32.gmra.mxu0 %v2409
      %v2617 = vpop.f32.mrf.mxu0
      %v2618 = vadd.f32 %v2240, %v2617
      %2619 = vmatmul.f32.gmra.mxu0 %v2412
      %v2620 = vpop.f32.mrf.mxu0
      %v2621 = vadd.f32 %v2240, %v2620
      %2622 = vmatmul.f32.gmra.mxu0 %v2415
      %v2623 = vpop.f32.mrf.mxu0
      %v2624 = vadd.f32 %v2240, %v2623
      %2625 = vmatmul.f32.gmra.mxu0 %v2418
      %v2626 = vpop.f32.mrf.mxu0
      %v2627 = vadd.f32 %v2240, %v2626
      %2628 = vmatmul.f32.gmra.mxu0 %v2421
      %v2629 = vpop.f32.mrf.mxu0
      %v2630 = vadd.f32 %v2240, %v2629
      %2631 = vmatmul.f32.gmra.mxu0 %v2424
      %v2632 = vpop.f32.mrf.mxu0
      %v2633 = vadd.f32 %v2240, %v2632
      %2634 = vmatmul.f32.gmra.mxu0 %v2427
      %v2635 = vpop.f32.mrf.mxu0
      %v2636 = vadd.f32 %v2240, %v2635
      %2637 = vmatmul.f32.gmra.mxu0 %v2430
      %v2638 = vpop.f32.mrf.mxu0
      %v2639 = vadd.f32 %v2240, %v2638
      %2640 = vmatmul.f32.gmra.mxu0 %v2433
      %v2641 = vpop.f32.mrf.mxu0
      %v2642 = vadd.f32 %v2240, %v2641
      %2643 = vdwg.mxu0
      %v2644 = vmax.f32 %v2453, 0.0
      %v2645 = vmax.f32 %v2456, 0.0
      %v2646 = vmax.f32 %v2459, 0.0
      %v2647 = vmax.f32 %v2462, 0.0
      %v2648 = vmax.f32 %v2465, 0.0
      %v2649 = vmax.f32 %v2468, 0.0
      %v2650 = vmax.f32 %v2471, 0.0
      %v2651 = vmax.f32 %v2474, 0.0
      %v2652 = vmax.f32 %v2477, 0.0
      %v2653 = vmax.f32 %v2480, 0.0
      %v2654 = vmax.f32 %v2483, 0.0
      %v2655 = vmax.f32 %v2486, 0.0
      %v2656 = vmax.f32 %v2489, 0.0
      %v2657 = vmax.f32 %v2492, 0.0
      %v2658 = vmax.f32 %v2495, 0.0
      %v2659 = vmax.f32 %v2498, 0.0
      %v2660 = vmax.f32 %v2501, 0.0
      %v2661 = vmax.f32 %v2504, 0.0
      %v2662 = vmax.f32 %v2507, 0.0
      %v2663 = vmax.f32 %v2510, 0.0
      %v2664 = vmax.f32 %v2513, 0.0
      %v2665 = vmax.f32 %v2516, 0.0
      %v2666 = vmax.f32 %v2519, 0.0
      %v2667 = vmax.f32 %v2522, 0.0
      %v2668 = vmax.f32 %v2525, 0.0
      %v2669 = vmax.f32 %v2528, 0.0
      %v2670 = vmax.f32 %v2531, 0.0
      %v2671 = vmax.f32 %v2534, 0.0
      %v2672 = vmax.f32 %v2537, 0.0
      %v2673 = vmax.f32 %v2540, 0.0
      %v2674 = vmax.f32 %v2543, 0.0
      %v2675 = vmax.f32 %v2546, 0.0
      %v2676 = vmax.f32 %v2549, 0.0
      %v2677 = vmax.f32 %v2552, 0.0
      %v2678 = vmax.f32 %v2555, 0.0
      %v2679 = vmax.f32 %v2558, 0.0
      %v2680 = vmax.f32 %v2561, 0.0
      %v2681 = vmax.f32 %v2564, 0.0
      %v2682 = vmax.f32 %v2567, 0.0
      %v2683 = vmax.f32 %v2570, 0.0
      %v2684 = vmax.f32 %v2573, 0.0
      %v2685 = vmax.f32 %v2576, 0.0
      %v2686 = vmax.f32 %v2579, 0.0
      %v2687 = vmax.f32 %v2582, 0.0
      %v2688 = vmax.f32 %v2585, 0.0
      %v2689 = vmax.f32 %v2588, 0.0
      %v2690 = vmax.f32 %v2591, 0.0
      %v2691 = vmax.f32 %v2594, 0.0
      %v2692 = vmax.f32 %v2597, 0.0
      %v2693 = vmax.f32 %v2600, 0.0
      %v2694 = vmax.f32 %v2603, 0.0
      %v2695 = vmax.f32 %v2606, 0.0
      %v2696 = vmax.f32 %v2609, 0.0
      %v2697 = vmax.f32 %v2612, 0.0
      %v2698 = vmax.f32 %v2615, 0.0
      %v2699 = vmax.f32 %v2618, 0.0
      %v2700 = vmax.f32 %v2621, 0.0
      %v2701 = vmax.f32 %v2624, 0.0
      %v2702 = vmax.f32 %v2627, 0.0
      %v2703 = vmax.f32 %v2630, 0.0
      %v2704 = vmax.f32 %v2633, 0.0
      %v2705 = vmax.f32 %v2636, 0.0
      %v2706 = vmax.f32 %v2639, 0.0
      %v2707 = vmax.f32 %v2642, 0.0
      %v2708 = vlaneseq
      %v2709 = vshrl.u32 %v2708, 7
      %v2710 = vadd.s32 %v2709, 8
      %v2711 = vadd.s32 %v2709, 16
      %v2712 = vadd.s32 %v2709, 24
      %v2713 = vadd.s32 %v2709, 32
      %v2714 = vadd.s32 %v2709, 40
      %v2715 = vadd.s32 %v2709, 48
      %v2716 = vadd.s32 %v2709, 56
      %v2717 = vld [vmem:[%s320] sm:$0xf]
      %v2718 = vperm.slane %v2717, 0
      %v2719 = vperm.slane %v2717, 1
      %v2720 = vperm.slane %v2717, 2
      %v2721 = vperm.slane %v2717, 3
      %vm2722 = vcmp.eq.s32.totalorder %v2709, %v2718
      %vm2723 = vcmp.eq.s32.totalorder %v2709, %v2719
      %vm2724 = vcmp.eq.s32.totalorder %v2709, %v2720
      %vm2725 = vcmp.eq.s32.totalorder %v2709, %v2721
      %vm2726 = vcmp.eq.s32.totalorder %v2710, %v2718
      %vm2727 = vcmp.eq.s32.totalorder %v2710, %v2719
      %vm2728 = vcmp.eq.s32.totalorder %v2710, %v2720
      %vm2729 = vcmp.eq.s32.totalorder %v2710, %v2721
      %vm2730 = vcmp.eq.s32.totalorder %v2711, %v2718
      %vm2731 = vcmp.eq.s32.totalorder %v2711, %v2719
      %vm2732 = vcmp.eq.s32.totalorder %v2711, %v2720
      %vm2733 = vcmp.eq.s32.totalorder %v2711, %v2721
      %vm2734 = vcmp.eq.s32.totalorder %v2712, %v2718
      %vm2735 = vcmp.eq.s32.totalorder %v2712, %v2719
      %vm2736 = vcmp.eq.s32.totalorder %v2712, %v2720
      %vm2737 = vcmp.eq.s32.totalorder %v2712, %v2721
      %vm2738 = vcmp.eq.s32.totalorder %v2713, %v2718
      %vm2739 = vcmp.eq.s32.totalorder %v2713, %v2719
      %vm2740 = vcmp.eq.s32.totalorder %v2713, %v2720
      %vm2741 = vcmp.eq.s32.totalorder %v2713, %v2721
      %vm2742 = vcmp.eq.s32.totalorder %v2714, %v2718
      %vm2743 = vcmp.eq.s32.totalorder %v2714, %v2719
      %vm2744 = vcmp.eq.s32.totalorder %v2714, %v2720
      %vm2745 = vcmp.eq.s32.totalorder %v2714, %v2721
      %vm2746 = vcmp.eq.s32.totalorder %v2715, %v2718
      %vm2747 = vcmp.eq.s32.totalorder %v2715, %v2719
      %vm2748 = vcmp.eq.s32.totalorder %v2715, %v2720
      %vm2749 = vcmp.eq.s32.totalorder %v2715, %v2721
      %vm2750 = vcmp.eq.s32.totalorder %v2716, %v2718
      %vm2751 = vcmp.eq.s32.totalorder %v2716, %v2719
      %vm2752 = vcmp.eq.s32.totalorder %v2716, %v2720
      %vm2753 = vcmp.eq.s32.totalorder %v2716, %v2721
      %v2754 = vsel %vm2722, 1, 0
      %v2755 = vsel %vm2723, 1, 0
      %v2756 = vsel %vm2724, 1, 0
      %v2757 = vsel %vm2725, 1, 0
      %v2758 = vsel %vm2726, 1, 0
      %v2759 = vsel %vm2727, 1, 0
      %v2760 = vsel %vm2728, 1, 0
      %v2761 = vsel %vm2729, 1, 0
      %v2762 = vsel %vm2730, 1, 0
      %v2763 = vsel %vm2731, 1, 0
      %v2764 = vsel %vm2732, 1, 0
      %v2765 = vsel %vm2733, 1, 0
      %v2766 = vsel %vm2734, 1, 0
      %v2767 = vsel %vm2735, 1, 0
      %v2768 = vsel %vm2736, 1, 0
      %v2769 = vsel %vm2737, 1, 0
      %v2770 = vsel %vm2738, 1, 0
      %v2771 = vsel %vm2739, 1, 0
      %v2772 = vsel %vm2740, 1, 0
      %v2773 = vsel %vm2741, 1, 0
      %v2774 = vsel %vm2742, 1, 0
      %v2775 = vsel %vm2743, 1, 0
      %v2776 = vsel %vm2744, 1, 0
      %v2777 = vsel %vm2745, 1, 0
      %v2778 = vsel %vm2746, 1, 0
      %v2779 = vsel %vm2747, 1, 0
      %v2780 = vsel %vm2748, 1, 0
      %v2781 = vsel %vm2749, 1, 0
      %v2782 = vsel %vm2750, 1, 0
      %v2783 = vsel %vm2751, 1, 0
      %v2784 = vsel %vm2752, 1, 0
      %v2785 = vsel %vm2753, 1, 0
      %v2786 = vcvt.s32.f32 %v2754
      %v2787 = vcvt.s32.f32 %v2755
      %v2788 = vcvt.s32.f32 %v2756
      %v2789 = vcvt.s32.f32 %v2757
      %v2790 = vcvt.s32.f32 %v2758
      %v2791 = vcvt.s32.f32 %v2759
      %v2792 = vcvt.s32.f32 %v2760
      %v2793 = vcvt.s32.f32 %v2761
      %v2794 = vcvt.s32.f32 %v2762
      %v2795 = vcvt.s32.f32 %v2763
      %v2796 = vcvt.s32.f32 %v2764
      %v2797 = vcvt.s32.f32 %v2765
      %v2798 = vcvt.s32.f32 %v2766
      %v2799 = vcvt.s32.f32 %v2767
      %v2800 = vcvt.s32.f32 %v2768
      %v2801 = vcvt.s32.f32 %v2769
      %v2802 = vcvt.s32.f32 %v2770
      %v2803 = vcvt.s32.f32 %v2771
      %v2804 = vcvt.s32.f32 %v2772
      %v2805 = vcvt.s32.f32 %v2773
      %v2806 = vcvt.s32.f32 %v2774
      %v2807 = vcvt.s32.f32 %v2775
      %v2808 = vcvt.s32.f32 %v2776
      %v2809 = vcvt.s32.f32 %v2777
      %v2810 = vcvt.s32.f32 %v2778
      %v2811 = vcvt.s32.f32 %v2779
      %v2812 = vcvt.s32.f32 %v2780
      %v2813 = vcvt.s32.f32 %v2781
      %v2814 = vcvt.s32.f32 %v2782
      %v2815 = vcvt.s32.f32 %v2783
      %v2816 = vcvt.s32.f32 %v2784
      %v2817 = vcvt.s32.f32 %v2785
      %v2818 = vld [vmem:[%s8] sm:$0xff]
      %v2819 = vld [vmem:[%s8 + $0x8] sm:$0xff]
      %v2820 = vld [vmem:[%s8 + $0x10] sm:$0xff]
      %v2821 = vld [vmem:[%s8 + $0x18] sm:$0xff]
      %v2822 = vld [vmem:[%s8 + $0x20] sm:$0xff]
      %v2823 = vld [vmem:[%s8 + $0x28] sm:$0xff]
      %v2824 = vld [vmem:[%s8 + $0x30] sm:$0xff]
      %v2825 = vld [vmem:[%s8 + $0x38] sm:$0xff]
      %2826 = vmatpush.msra.mxu0 %v2659
      %2827 = vmatpush.msra.mxu0 %v2658
      %2828 = vmatpush.msra.mxu0 %v2657
      %2829 = vmatpush.msra.mxu0 %v2656
      %2830 = vmatpush.msra.mxu0 %v2655
      %2831 = vmatpush.msra.mxu0 %v2654
      %2832 = vmatpush.msra.mxu0 %v2653
      %2833 = vmatpush.msra.mxu0 %v2652
      %2834 = vmatpush.msra.mxu0 %v2651
      %2835 = vmatpush.msra.mxu0 %v2650
      %2836 = vmatpush.msra.mxu0 %v2649
      %2837 = vmatpush.msra.mxu0 %v2648
      %2838 = vmatpush.msra.mxu0 %v2647
      %2839 = vmatpush.msra.mxu0 %v2646
      %2840 = vmatpush.msra.mxu0 %v2645
      %2841 = vmatpush.msra.mxu0 %v2644
      %2842 = vmatmul.f32.gmra.mxu0 %v2786
      %v2843 = vpop.f32.mrf.mxu0
      %v2844 = vadd.f32 0.0, %v2843
      %2845 = vmatmul.f32.gmra.mxu0 %v2790
      %v2846 = vpop.f32.mrf.mxu0
      %v2847 = vadd.f32 0.0, %v2846
      %2848 = vmatmul.f32.gmra.mxu0 %v2794
      %v2849 = vpop.f32.mrf.mxu0
      %v2850 = vadd.f32 0.0, %v2849
      %2851 = vmatmul.f32.gmra.mxu0 %v2798
      %v2852 = vpop.f32.mrf.mxu0
      %v2853 = vadd.f32 0.0, %v2852
      %2854 = vmatmul.f32.gmra.mxu0 %v2802
      %v2855 = vpop.f32.mrf.mxu0
      %v2856 = vadd.f32 0.0, %v2855
      %2857 = vmatmul.f32.gmra.mxu0 %v2806
      %v2858 = vpop.f32.mrf.mxu0
      %v2859 = vadd.f32 0.0, %v2858
      %2860 = vmatmul.f32.gmra.mxu0 %v2810
      %v2861 = vpop.f32.mrf.mxu0
      %v2862 = vadd.f32 0.0, %v2861
      %2863 = vmatmul.f32.gmra.mxu0 %v2814
      %v2864 = vpop.f32.mrf.mxu0
      %v2865 = vadd.f32 0.0, %v2864
      %2866 = vdwg.mxu0
      %2867 = vmatpush.msra.mxu0 %v2675
      %2868 = vmatpush.msra.mxu0 %v2674
      %2869 = vmatpush.msra.mxu0 %v2673
      %2870 = vmatpush.msra.mxu0 %v2672
      %2871 = vmatpush.msra.mxu0 %v2671
      %2872 = vmatpush.msra.mxu0 %v2670
      %2873 = vmatpush.msra.mxu0 %v2669
      %2874 = vmatpush.msra.mxu0 %v2668
      %2875 = vmatpush.msra.mxu0 %v2667
      %2876 = vmatpush.msra.mxu0 %v2666
      %2877 = vmatpush.msra.mxu0 %v2665
      %2878 = vmatpush.msra.mxu0 %v2664
      %2879 = vmatpush.msra.mxu0 %v2663
      %2880 = vmatpush.msra.mxu0 %v2662
      %2881 = vmatpush.msra.mxu0 %v2661
      %2882 = vmatpush.msra.mxu0 %v2660
      %2883 = vmatmul.f32.gmra.mxu0 %v2787
      %v2884 = vpop.f32.mrf.mxu0
      %v2885 = vadd.f32 %v2844, %v2884
      %2886 = vmatmul.f32.gmra.mxu0 %v2791
      %v2887 = vpop.f32.mrf.mxu0
      %v2888 = vadd.f32 %v2847, %v2887
      %2889 = vmatmul.f32.gmra.mxu0 %v2795
      %v2890 = vpop.f32.mrf.mxu0
      %v2891 = vadd.f32 %v2850, %v2890
      %2892 = vmatmul.f32.gmra.mxu0 %v2799
      %v2893 = vpop.f32.mrf.mxu0
      %v2894 = vadd.f32 %v2853, %v2893
      %2895 = vmatmul.f32.gmra.mxu0 %v2803
      %v2896 = vpop.f32.mrf.mxu0
      %v2897 = vadd.f32 %v2856, %v2896
      %2898 = vmatmul.f32.gmra.mxu0 %v2807
      %v2899 = vpop.f32.mrf.mxu0
      %v2900 = vadd.f32 %v2859, %v2899
      %2901 = vmatmul.f32.gmra.mxu0 %v2811
      %v2902 = vpop.f32.mrf.mxu0
      %v2903 = vadd.f32 %v2862, %v2902
      %2904 = vmatmul.f32.gmra.mxu0 %v2815
      %v2905 = vpop.f32.mrf.mxu0
      %v2906 = vadd.f32 %v2865, %v2905
      %2907 = vdwg.mxu0
      %2908 = vmatpush.msra.mxu0 %v2691
      %2909 = vmatpush.msra.mxu0 %v2690
      %2910 = vmatpush.msra.mxu0 %v2689
      %2911 = vmatpush.msra.mxu0 %v2688
      %2912 = vmatpush.msra.mxu0 %v2687
      %2913 = vmatpush.msra.mxu0 %v2686
      %2914 = vmatpush.msra.mxu0 %v2685
      %2915 = vmatpush.msra.mxu0 %v2684
      %2916 = vmatpush.msra.mxu0 %v2683
      %2917 = vmatpush.msra.mxu0 %v2682
      %2918 = vmatpush.msra.mxu0 %v2681
      %2919 = vmatpush.msra.mxu0 %v2680
      %2920 = vmatpush.msra.mxu0 %v2679
      %2921 = vmatpush.msra.mxu0 %v2678
      %2922 = vmatpush.msra.mxu0 %v2677
      %2923 = vmatpush.msra.mxu0 %v2676
      %2924 = vmatmul.f32.gmra.mxu0 %v2788
      %v2925 = vpop.f32.mrf.mxu0
      %v2926 = vadd.f32 %v2885, %v2925
      %2927 = vmatmul.f32.gmra.mxu0 %v2792
      %v2928 = vpop.f32.mrf.mxu0
      %v2929 = vadd.f32 %v2888, %v2928
      %2930 = vmatmul.f32.gmra.mxu0 %v2796
      %v2931 = vpop.f32.mrf.mxu0
      %v2932 = vadd.f32 %v2891, %v2931
      %2933 = vmatmul.f32.gmra.mxu0 %v2800
      %v2934 = vpop.f32.mrf.mxu0
      %v2935 = vadd.f32 %v2894, %v2934
      %2936 = vmatmul.f32.gmra.mxu0 %v2804
      %v2937 = vpop.f32.mrf.mxu0
      %v2938 = vadd.f32 %v2897, %v2937
      %2939 = vmatmul.f32.gmra.mxu0 %v2808
      %v2940 = vpop.f32.mrf.mxu0
      %v2941 = vadd.f32 %v2900, %v2940
      %2942 = vmatmul.f32.gmra.mxu0 %v2812
      %v2943 = vpop.f32.mrf.mxu0
      %v2944 = vadd.f32 %v2903, %v2943
      %2945 = vmatmul.f32.gmra.mxu0 %v2816
      %v2946 = vpop.f32.mrf.mxu0
      %v2947 = vadd.f32 %v2906, %v2946
      %2948 = vdwg.mxu0
      %2949 = vmatpush.msra.mxu0 %v2707
      %2950 = vmatpush.msra.mxu0 %v2706
      %2951 = vmatpush.msra.mxu0 %v2705
      %2952 = vmatpush.msra.mxu0 %v2704
      %2953 = vmatpush.msra.mxu0 %v2703
      %2954 = vmatpush.msra.mxu0 %v2702
      %2955 = vmatpush.msra.mxu0 %v2701
      %2956 = vmatpush.msra.mxu0 %v2700
      %2957 = vmatpush.msra.mxu0 %v2699
      %2958 = vmatpush.msra.mxu0 %v2698
      %2959 = vmatpush.msra.mxu0 %v2697
      %2960 = vmatpush.msra.mxu0 %v2696
      %2961 = vmatpush.msra.mxu0 %v2695
      %2962 = vmatpush.msra.mxu0 %v2694
      %2963 = vmatpush.msra.mxu0 %v2693
      %2964 = vmatpush.msra.mxu0 %v2692
      %2965 = vmatmul.f32.gmra.mxu0 %v2789
      %v2966 = vpop.f32.mrf.mxu0
      %v2967 = vadd.f32 %v2926, %v2966
      %2968 = vmatmul.f32.gmra.mxu0 %v2793
      %v2969 = vpop.f32.mrf.mxu0
      %v2970 = vadd.f32 %v2929, %v2969
      %2971 = vmatmul.f32.gmra.mxu0 %v2797
      %v2972 = vpop.f32.mrf.mxu0
      %v2973 = vadd.f32 %v2932, %v2972
      %2974 = vmatmul.f32.gmra.mxu0 %v2801
      %v2975 = vpop.f32.mrf.mxu0
      %v2976 = vadd.f32 %v2935, %v2975
      %2977 = vmatmul.f32.gmra.mxu0 %v2805
      %v2978 = vpop.f32.mrf.mxu0
      %v2979 = vadd.f32 %v2938, %v2978
      %2980 = vmatmul.f32.gmra.mxu0 %v2809
      %v2981 = vpop.f32.mrf.mxu0
      %v2982 = vadd.f32 %v2941, %v2981
      %2983 = vmatmul.f32.gmra.mxu0 %v2813
      %v2984 = vpop.f32.mrf.mxu0
      %v2985 = vadd.f32 %v2944, %v2984
      %2986 = vmatmul.f32.gmra.mxu0 %v2817
      %v2987 = vpop.f32.mrf.mxu0
      %v2988 = vadd.f32 %v2947, %v2987
      %2989 = vdwg.mxu0
      %v2990 = vadd.f32 %v2818, %v2967
      %v2991 = vadd.f32 %v2819, %v2970
      %v2992 = vadd.f32 %v2820, %v2973
      %v2993 = vadd.f32 %v2821, %v2976
      %v2994 = vadd.f32 %v2822, %v2979
      %v2995 = vadd.f32 %v2823, %v2982
      %v2996 = vadd.f32 %v2824, %v2985
      %v2997 = vadd.f32 %v2825, %v2988
      %2998 = vst.msk [vmem:[%s8] sm:$0xff] %vm2242, %v2990
      %2999 = vst.msk [vmem:[%s8 + $0x8] sm:$0xff] %vm2242, %v2991
      %3000 = vst.msk [vmem:[%s8 + $0x10] sm:$0xff] %vm2242, %v2992
      %3001 = vst.msk [vmem:[%s8 + $0x18] sm:$0xff] %vm2242, %v2993
      %3002 = vst.msk [vmem:[%s8 + $0x20] sm:$0xff] %vm2242, %v2994
      %3003 = vst.msk [vmem:[%s8 + $0x28] sm:$0xff] %vm2242, %v2995
      %3004 = vst.msk [vmem:[%s8 + $0x30] sm:$0xff] %vm2242, %v2996
      %3005 = vst.msk [vmem:[%s8 + $0x38] sm:$0xff] %vm2242, %v2997
      // Predicated region
      $region57: #{tpu_custom_call.1} parent=51 // pred_check
        %p3006 = pneg %p215
      $region58: #{tpu_custom_call.1} parent=51 // pred_check_branch
        %3008 = sbr.rel (%p3006) target = $region60
      $region59: #{tpu_custom_call.1} parent=51 // pred_region
        _
      $region60: #{tpu_custom_call.1} parent=51 // pred_fallthru
        _
      // Predicated region
      $region61: #{tpu_custom_call.1} parent=51 // pred_check
        %p3009 = pneg %p215
      $region62: #{tpu_custom_call.1} parent=51 // pred_check_branch
        %3011 = sbr.rel (%p3009) target = $region64
      $region63: #{tpu_custom_call.1} parent=51 // pred_region
        _
      $region64: #{tpu_custom_call.1} parent=51 // pred_fallthru
        _
    $region52: #{tpu_custom_call.1} parent=5 // pred_fallthru
      _
    %p3012 = scmp.le.s32.totalorder 2, %s14
    // Predicated region
    $region65: #{tpu_custom_call.1} parent=5 // pred_check
      %p3013 = pneg %p3012
    $region66: #{tpu_custom_call.1} parent=5 // pred_check_branch
      %3015 = sbr.rel (%p3013) target = $region68
    $region67: #{tpu_custom_call.1} parent=5 // pred_region
      %s3016 = ssub.s32 %s14, 2
    $region68: #{tpu_custom_call.1} parent=5 // pred_fallthru
      _
  $region6: #{tpu_custom_call.1} parent=0 // loop_footer
    %s18 = sadd.s32 1, %s14
  $region7: #{tpu_custom_call.1} parent=0 // loop_footer_branch
    %13 = sbr.rel target = $region3
  $region8: #{tpu_custom_call.1} parent=0 // loop_exit
    _

</llo_original>
